<compile_context>
chip_gen: v7x
topology: tpu7x:2x2x1
jax: 0.10.0
libtpu: 0.0.40
codegen_flags: <defaults>
</compile_context>

<pallas_src>
import jax
import jax.numpy as jnp
from jax.experimental import pallas as pl
from jax.experimental.pallas import tpu as pltpu

# ----------------------------- hyper params ---------------------------------
VOCAB = 50
VOCAB_PAD = 128     # one-hot / table lane width (rows >= VOCAB are zero)
E = 32              # opt.embed_dim
C = 8               # opt.in_channels
P = 3               # opt.polarities_dim
L = 16              # context sequence length
LA = 8              # aspect sequence length
KS = (3, 4, 5)      # context conv kernel sizes

# Causal left-pad.  Any pad >= k-1 gives identical results; 8 keeps every
# per-sample row count a multiple of 8 (layout-preserving reshapes).
PAD_CTX = 8
PAD_ASP = 8
LP = L + PAD_CTX        # 24 padded context rows
LAP = LA + PAD_ASP      # 16 padded aspect rows
LT = LP + LAP           # 40 combined rows per sample

# raw (per-tap) conv weight rows in Wall [27, E, C]
#   0..2   aspect (k=3)
#   3..5   context_x k=3, 6..9 k=4, 10..14 k=5
#   15..17 context_y k=3, 18..21 k=4, 22..26 k=5
OFF_A = 0
OFF_X = {3: 3, 4: 6, 5: 10}
OFF_Y = {3: 15, 4: 18, 5: 22}
N_W = 27
# bias rows in Ball [7, C]: 0 aspect, 1..3 x(3,4,5), 4..6 y(3,4,5)

# shift-grouped RHS packing
G = 128                         # lanes per shift group (tile aligned)
SHIFT0 = PAD_CTX - (max(KS) - 1)   # smallest absolute row shift = 4
NGROUPS = max(KS)               # shifts 4..8 -> 5 groups
NCOL = NGROUPS * G              # 640
# column offsets inside a group
COL_X3, COL_Y3 = 0, 8
COL_X4, COL_Y4 = 16, 24
COL_X5, COL_Y5 = 32, 40
COL_ASP = 48

P_PAD = 128                     # lane-dense classifier output width
SENTINEL = VOCAB_PAD - 1        # index whose embedding row is exactly zero

TB_MAX = 128                    # batch tile (samples per grid step)
VMEM_LIMIT = 48 * 1024 * 1024   # explicit scoped-VMEM budget (fits v7x 64MiB)


def _round_up(x, m):
    return (x + m - 1) // m * m


# ------------------------------- kernel -------------------------------------
def gcae_kernel(idx_ref, emb_ref, wpack_ref, bias_ref, wd_ref, bd_ref, out_ref):
    TB = out_ref.shape[0]
    R = TB * LT

    # ---- fused embedding gather: one-hot matmul (sentinel rows -> zeros) ----
    idx = idx_ref[...]                                             # [R, 1] i32
    vocab_iota = jax.lax.broadcasted_iota(jnp.int32, (R, VOCAB_PAD), 1)
    onehot = (vocab_iota == idx).astype(jnp.float32)               # [R, VOCAB_PAD]
    comb = jnp.dot(onehot, emb_ref[...],
                   preferred_element_type=jnp.float32)             # [R, E]

    # ---- ONE fused MXU call for all 27 conv taps (shift-grouped RHS) --------
    z = jnp.dot(comb, wpack_ref[...],
                preferred_element_type=jnp.float32)                # [R, NCOL]
    z = z.reshape(TB, LT, NCOL)            # layout-preserving (LT % 8 == 0)

    bias = bias_ref[...]                                           # [1, G]

    # ---- context conv: 5 lane-dense 128-wide slice-adds ---------------------
    acc_ctx = z[:, SHIFT0:SHIFT0 + L, 0:G]
    for g in range(1, NGROUPS):
        t = SHIFT0 + g
        acc_ctx = acc_ctx + z[:, t:t + L, g * G:(g + 1) * G]
    acc_ctx = acc_ctx + bias                                       # [TB, L, G]

    # ---- aspect conv: taps live in the shift-6..8 groups, cols 48:56 --------
    acc_asp = z[:, LP + 6:LP + 6 + LA, 2 * G:3 * G]
    acc_asp = acc_asp + z[:, LP + 7:LP + 7 + LA, 3 * G:4 * G]
    acc_asp = acc_asp + z[:, LP + 8:LP + 8 + LA, 4 * G:5 * G]
    asp_v = jnp.max(jax.nn.relu(acc_asp + bias), axis=1, keepdims=True)  # [TB,1,G]
    # broadcast the 8 aspect channels (cols 48:56) to every 8-col block
    asp_y = jnp.concatenate([asp_v[:, :, COL_ASP:COL_ASP + C]] * (G // C),
                            axis=2)                                # [TB, 1, G]

    # ---- gating, lane-dense over the full slab ------------------------------
    x_act = jnp.tanh(acc_ctx)                                      # EUP
    y_act = jax.nn.relu(acc_ctx + asp_y)                           # VPU
    # align y_k columns (8:16, 24:32, 40:48) onto x_k columns (0:8, 16:24, 32:40)
    y_ali = jnp.concatenate([y_act[:, :, C:], y_act[:, :, :C]], axis=2)
    gated = x_act * y_ali
    pooled = jnp.max(gated, axis=1)                                # [TB, G]

    # TODO(synk): nn.Dropout is identity at inference time; no kernel op emitted.
    # garbage lanes of `pooled` hit all-zero rows of wd_pack -> contribute 0.
    out_ref[...] = (jnp.dot(pooled, wd_ref[...],
                            preferred_element_type=jnp.float32)
                    + bd_ref[...])                                 # [TB, P_PAD]


# ---------------------------- weight packing ---------------------------------
def _pack_params(params):
    assert VOCAB <= VOCAB_PAD
    # TODO(synk): a vocab > 128 would need the one-hot contraction tiled over
    # the vocab axis (or a DMA-gather path); not needed at this size.
    emb = params["embedding"]                                      # [VOCAB, E]
    emb_pad = jnp.zeros((VOCAB_PAD, E), jnp.float32).at[:VOCAB].set(emb)

    wall, ball = params["wall"], params["ball"]                    # [27,E,C], [7,C]
    wd, bd = params["wd"], params["bd"]                            # [3C,P], [1,P]

    wpack = jnp.zeros((E, NCOL), jnp.float32)
    for g in range(NGROUPS):
        t = SHIFT0 + g                      # absolute row shift into padded slab
        base = g * G
        # k=5 taps exist for every shift 4..8
        wpack = wpack.at[:, base + COL_X5:base + COL_X5 + C].set(wall[OFF_X[5] + (t - 4)])
        wpack = wpack.at[:, base + COL_Y5:base + COL_Y5 + C].set(wall[OFF_Y[5] + (t - 4)])
        if t >= 5:                          # k=4 taps
            wpack = wpack.at[:, base + COL_X4:base + COL_X4 + C].set(wall[OFF_X[4] + (t - 5)])
            wpack = wpack.at[:, base + COL_Y4:base + COL_Y4 + C].set(wall[OFF_Y[4] + (t - 5)])
        if t >= 6:                          # k=3 taps + aspect taps (k=3)
            wpack = wpack.at[:, base + COL_X3:base + COL_X3 + C].set(wall[OFF_X[3] + (t - 6)])
            wpack = wpack.at[:, base + COL_Y3:base + COL_Y3 + C].set(wall[OFF_Y[3] + (t - 6)])
            wpack = wpack.at[:, base + COL_ASP:base + COL_ASP + C].set(wall[OFF_A + (t - 6)])

    bias_pack = jnp.zeros((1, G), jnp.float32)
    bias_pack = bias_pack.at[0, COL_X3:COL_X3 + C].set(ball[1])
    bias_pack = bias_pack.at[0, COL_Y3:COL_Y3 + C].set(ball[4])
    bias_pack = bias_pack.at[0, COL_X4:COL_X4 + C].set(ball[2])
    bias_pack = bias_pack.at[0, COL_Y4:COL_Y4 + C].set(ball[5])
    bias_pack = bias_pack.at[0, COL_X5:COL_X5 + C].set(ball[3])
    bias_pack = bias_pack.at[0, COL_Y5:COL_Y5 + C].set(ball[6])
    bias_pack = bias_pack.at[0, COL_ASP:COL_ASP + C].set(ball[0])

    wd_pack = jnp.zeros((G, P_PAD), jnp.float32)
    wd_pack = wd_pack.at[COL_X3:COL_X3 + C, :P].set(wd[0:C])           # k=3 block
    wd_pack = wd_pack.at[COL_X4:COL_X4 + C, :P].set(wd[C:2 * C])       # k=4 block
    wd_pack = wd_pack.at[COL_X5:COL_X5 + C, :P].set(wd[2 * C:3 * C])   # k=5 block
    bd_pack = jnp.zeros((1, P_PAD), jnp.float32).at[:, :P].set(bd)

    return emb_pad, wpack, bias_pack, wd_pack, bd_pack


# ------------------------------- wrapper -------------------------------------
def gcae_forward(text_raw_indices, aspect_indices, params, tb=TB_MAX):
    B = text_raw_indices.shape[0]
    ctx_idx = text_raw_indices.astype(jnp.int32)                   # [B, L]
    asp_idx = aspect_indices.astype(jnp.int32)                     # [B, LA]

    # ConstantPad2d((0,0,k-1,0)) == prepend zero rows; sentinel tokens hit an
    # all-zero embedding row, so padding happens "for free" inside the kernel.
    ctx_p = jnp.concatenate(
        [jnp.full((B, PAD_CTX), SENTINEL, jnp.int32), ctx_idx], axis=1)   # [B, LP]
    asp_p = jnp.concatenate(
        [jnp.full((B, PAD_ASP), SENTINEL, jnp.int32), asp_idx], axis=1)   # [B, LAP]
    comb_idx = jnp.concatenate([ctx_p, asp_p], axis=1)             # [B, LT]

    # batch tiling (keep TB a multiple of 8; on v7x use B >= 2*TB so the
    # "parallel" grid axis splits across both TensorCores).
    TB = min(tb, _round_up(B, 8))
    nb = pl.cdiv(B, TB)
    B_pad = nb * TB
    if B_pad != B:
        comb_idx = jnp.pad(comb_idx, ((0, B_pad - B), (0, 0)),
                           constant_values=SENTINEL)
    idx_col = comb_idx.reshape(B_pad * LT, 1)                      # [R, 1] i32

    emb_pad, wpack, bias_pack, wd_pack, bd_pack = _pack_params(params)

    R = B_pad * LT
    flops = 2 * R * (VOCAB_PAD * E + E * NCOL) + 2 * B_pad * G * P_PAD
    transcendentals = B_pad * L * G
    bytes_accessed = 4 * (R + VOCAB_PAD * E + E * NCOL + G + G * P_PAD
                          + P_PAD + B_pad * P_PAD)

    out = pl.pallas_call(
        gcae_kernel,
        out_shape=jax.ShapeDtypeStruct((B_pad, P_PAD), jnp.float32),
        grid=(nb,),
        in_specs=[
            pl.BlockSpec((TB * LT, 1), lambda b: (b, 0)),          # token indices
            pl.BlockSpec((VOCAB_PAD, E), lambda b: (0, 0)),        # embedding table
            pl.BlockSpec((E, NCOL), lambda b: (0, 0)),             # shift-grouped conv W
            pl.BlockSpec((1, G), lambda b: (0, 0)),                # packed conv biases
            pl.BlockSpec((G, P_PAD), lambda b: (0, 0)),            # packed dense W
            pl.BlockSpec((1, P_PAD), lambda b: (0, 0)),            # packed dense b
        ],
        out_specs=pl.BlockSpec((TB, P_PAD), lambda b: (b, 0)),
        compiler_params=pltpu.CompilerParams(
            dimension_semantics=("parallel",),
            vmem_limit_bytes=VMEM_LIMIT),
        cost_estimate=pl.CostEstimate(flops=flops,
                                      transcendentals=transcendentals,
                                      bytes_accessed=bytes_accessed),
    )(idx_col, emb_pad, wpack, bias_pack, wd_pack, bd_pack)
    return out[:B, :P]                                             # [B, P]


# ----------------------- pure-JAX reference (checking) ------------------------
def gcae_reference(text_raw_indices, aspect_indices, params):
    emb = params["embedding"]
    ctx = jnp.take(emb, text_raw_indices, axis=0)
    asp = jnp.take(emb, aspect_indices, axis=0)
    ctx_pad = jnp.pad(ctx, ((0, 0), (PAD_CTX, 0), (0, 0)))
    asp_pad = jnp.pad(asp, ((0, 0), (PAD_ASP, 0), (0, 0)))
    wall, ball = params["wall"], params["ball"]

    def conv(x_pad, out_len, w_off, k, pad):
        off = pad - (k - 1)
        acc = jnp.zeros((x_pad.shape[0], out_len, C), jnp.float32)
        for j in range(k):
            acc += jnp.einsum("ble,ec->blc",
                              x_pad[:, off + j:off + j + out_len, :], wall[w_off + j])
        return acc

    a = jax.nn.relu(conv(asp_pad, LA, OFF_A, 3, PAD_ASP) + ball[0])
    aspect_v = jnp.max(a, axis=1, keepdims=True)                   # [B, 1, C]
    pooled = []
    for i, k in enumerate(KS):
        xk = jnp.tanh(conv(ctx_pad, L, OFF_X[k], k, PAD_CTX) + ball[1 + i])
        yk = jax.nn.relu(conv(ctx_pad, L, OFF_Y[k], k, PAD_CTX) + ball[4 + i] + aspect_v)
        pooled.append(jnp.max(xk * yk, axis=1))                    # [B, C]
    res = jnp.concatenate(pooled, axis=1)                          # [B, 3C]
    return res @ params["wd"] + params["bd"]                       # [B, P]


# --------------------------------- params -------------------------------------
def init_params(key):
    k0, k1, k2, k3, k4 = jax.random.split(key, 5)
    embedding = jax.random.normal(k0, (VOCAB, E), jnp.float32) * 0.1
    embedding = embedding.at[0].set(0.0)     # padding index row
    wall = jax.random.normal(k1, (N_W, E, C), jnp.float32) * (1.0 / jnp.sqrt(E))
    ball = jax.random.normal(k2, (7, C), jnp.float32) * 0.01
    wd = jax.random.normal(k3, (3 * C, P), jnp.float32) * (1.0 / jnp.sqrt(3 * C))
    bd = jax.random.normal(k4, (1, P), jnp.float32) * 0.01
    return dict(embedding=embedding, wall=wall, ball=ball, wd=wd, bd=bd)


if __name__ == "__main__":
    key = jax.random.PRNGKey(0)
    kp, kt, ka = jax.random.split(key, 3)
    params = init_params(kp)

    B = 2
    text_raw_indices = jax.random.randint(kt, (B, L), 1, VOCAB, dtype=jnp.int32)
    aspect_indices = jax.random.randint(ka, (B, LA), 1, VOCAB, dtype=jnp.int32)

    out = gcae_forward(text_raw_indices, aspect_indices, params)
    out = jax.block_until_ready(out)
    assert out.shape == (B, P) and out.dtype == jnp.float32

    ref = gcae_reference(text_raw_indices, aspect_indices, params)
    assert jnp.allclose(out, ref, atol=2e-4, rtol=2e-4), (out, ref)

    print("KERNEL_OK")
</pallas_src>

<mosaic_0001>
module attributes {stable_mosaic.version = 11 : i64} {
  func.func @gcae_kernel(%arg0: i32, %arg1: memref<320x1xi32, #tpu.memory_space<vmem>>, %arg2: memref<128x32xf32, #tpu.memory_space<vmem>>, %arg3: memref<32x640xf32, #tpu.memory_space<vmem>>, %arg4: memref<1x128xf32, #tpu.memory_space<vmem>>, %arg5: memref<128x128xf32, #tpu.memory_space<vmem>>, %arg6: memref<1x128xf32, #tpu.memory_space<vmem>>, %arg7: memref<8x128xf32, #tpu.memory_space<vmem>>) attributes {dimension_semantics = [#tpu.dimension_semantics<parallel>], iteration_bounds = array<i64: 1>, scalar_prefetch = 0 : i64, scratch_operands = 0 : i64, tpu.core_type = #tpu.core_type<tc>, window_params = [{transform_indices = @transform_0, window_bounds = array<i64: 320, 1>}, {pipeline_mode = #tpu.pipeline_mode<synchronous>, transform_indices = @transform_1, window_bounds = array<i64: 128, 32>}, {pipeline_mode = #tpu.pipeline_mode<synchronous>, transform_indices = @transform_2, window_bounds = array<i64: 32, 640>}, {pipeline_mode = #tpu.pipeline_mode<synchronous>, transform_indices = @transform_3, window_bounds = array<i64: 1, 128>}, {pipeline_mode = #tpu.pipeline_mode<synchronous>, transform_indices = @transform_4, window_bounds = array<i64: 128, 128>}, {pipeline_mode = #tpu.pipeline_mode<synchronous>, transform_indices = @transform_5, window_bounds = array<i64: 1, 128>}, {transform_indices = @transform_6, window_bounds = array<i64: 8, 128>}]} {
    %c0 = arith.constant 0 : index
    %c0_0 = arith.constant 0 : index
    %0 = vector.load %arg1[%c0, %c0_0] : memref<320x1xi32, #tpu.memory_space<vmem>>, vector<320x1xi32>
    %1 = tpu.iota {dimensions = array<i32: 1>} : vector<320x128xi32>
    %2 = vector.broadcast %0 : vector<320x1xi32> to vector<320x128xi32>
    %3 = arith.cmpi eq, %1, %2 : vector<320x128xi32>
    %4 = arith.extui %3 : vector<320x128xi1> to vector<320x128xi32>
    %5 = arith.sitofp %4 : vector<320x128xi32> to vector<320x128xf32>
    %c0_1 = arith.constant 0 : index
    %c0_2 = arith.constant 0 : index
    %6 = vector.load %arg2[%c0_1, %c0_2] : memref<128x32xf32, #tpu.memory_space<vmem>>, vector<128x32xf32>
    %cst = arith.constant dense<0.000000e+00> : vector<320x32xf32>
    %7 = tpu.matmul %5, %6, %cst {dimension_numbers = #tpu.dot_dimension_numbers<[1], [0], [0], [1], [0, 0, 1, 1], [], []>} : vector<320x128xf32>, vector<128x32xf32>, vector<320x32xf32> -> vector<320x32xf32>
    %c0_3 = arith.constant 0 : index
    %c0_4 = arith.constant 0 : index
    %8 = vector.load %arg3[%c0_3, %c0_4] : memref<32x640xf32, #tpu.memory_space<vmem>>, vector<32x640xf32>
    %cst_5 = arith.constant dense<0.000000e+00> : vector<320x640xf32>
    %9 = tpu.matmul %7, %8, %cst_5 {dimension_numbers = #tpu.dot_dimension_numbers<[1], [0], [0], [1], [0, 0, 1, 1], [], []>} : vector<320x32xf32>, vector<32x640xf32>, vector<320x640xf32> -> vector<320x640xf32>
    %10 = vector.shape_cast %9 : vector<320x640xf32> to vector<8x40x640xf32>
    %c0_6 = arith.constant 0 : index
    %c0_7 = arith.constant 0 : index
    %11 = vector.load %arg4[%c0_6, %c0_7] : memref<1x128xf32, #tpu.memory_space<vmem>>, vector<1x128xf32>
    %12 = vector.extract_strided_slice %10 {offsets = [0, 4, 0], sizes = [8, 16, 128], strides = [1, 1, 1]} : vector<8x40x640xf32> to vector<8x16x128xf32>
    %13 = vector.extract_strided_slice %10 {offsets = [0, 5, 128], sizes = [8, 16, 128], strides = [1, 1, 1]} : vector<8x40x640xf32> to vector<8x16x128xf32>
    %14 = arith.addf %12, %13 : vector<8x16x128xf32>
    %15 = vector.extract_strided_slice %10 {offsets = [0, 6, 256], sizes = [8, 16, 128], strides = [1, 1, 1]} : vector<8x40x640xf32> to vector<8x16x128xf32>
    %16 = arith.addf %14, %15 : vector<8x16x128xf32>
    %17 = vector.extract_strided_slice %10 {offsets = [0, 7, 384], sizes = [8, 16, 128], strides = [1, 1, 1]} : vector<8x40x640xf32> to vector<8x16x128xf32>
    %18 = arith.addf %16, %17 : vector<8x16x128xf32>
    %19 = vector.extract_strided_slice %10 {offsets = [0, 8, 512], sizes = [8, 16, 128], strides = [1, 1, 1]} : vector<8x40x640xf32> to vector<8x16x128xf32>
    %20 = arith.addf %18, %19 : vector<8x16x128xf32>
    %21 = vector.shape_cast %11 : vector<1x128xf32> to vector<1x1x128xf32>
    %22 = vector.broadcast %21 : vector<1x1x128xf32> to vector<8x16x128xf32>
    %23 = arith.addf %20, %22 : vector<8x16x128xf32>
    %24 = vector.extract_strided_slice %10 {offsets = [0, 30, 256], sizes = [8, 8, 128], strides = [1, 1, 1]} : vector<8x40x640xf32> to vector<8x8x128xf32>
    %25 = vector.extract_strided_slice %10 {offsets = [0, 31, 384], sizes = [8, 8, 128], strides = [1, 1, 1]} : vector<8x40x640xf32> to vector<8x8x128xf32>
    %26 = arith.addf %24, %25 : vector<8x8x128xf32>
    %27 = vector.extract_strided_slice %10 {offsets = [0, 32, 512], sizes = [8, 8, 128], strides = [1, 1, 1]} : vector<8x40x640xf32> to vector<8x8x128xf32>
    %28 = arith.addf %26, %27 : vector<8x8x128xf32>
    %29 = vector.shape_cast %11 : vector<1x128xf32> to vector<1x1x128xf32>
    %30 = vector.broadcast %29 : vector<1x1x128xf32> to vector<8x8x128xf32>
    %31 = arith.addf %28, %30 : vector<8x8x128xf32>
    %cst_8 = arith.constant 0.000000e+00 : f32
    %32 = vector.broadcast %cst_8 : f32 to vector<8x8x128xf32>
    %33 = arith.maximumf %31, %32 : vector<8x8x128xf32>
    %cst_9 = arith.constant dense<0xFF800000> : vector<8x128xf32>
    %34 = vector.multi_reduction <maximumf>, %33, %cst_9 [1] : vector<8x8x128xf32> to vector<8x128xf32>
    %35 = vector.shape_cast %34 : vector<8x128xf32> to vector<8x1x128xf32>
    %36 = vector.extract_strided_slice %35 {offsets = [0, 0, 48], sizes = [8, 1, 8], strides = [1, 1, 1]} : vector<8x1x128xf32> to vector<8x1x8xf32>
    %37 = tpu.concatenate %36, %36, %36, %36, %36, %36, %36, %36, %36, %36, %36, %36, %36, %36, %36, %36 in 2 : vector<8x1x8xf32>, vector<8x1x8xf32>, vector<8x1x8xf32>, vector<8x1x8xf32>, vector<8x1x8xf32>, vector<8x1x8xf32>, vector<8x1x8xf32>, vector<8x1x8xf32>, vector<8x1x8xf32>, vector<8x1x8xf32>, vector<8x1x8xf32>, vector<8x1x8xf32>, vector<8x1x8xf32>, vector<8x1x8xf32>, vector<8x1x8xf32>, vector<8x1x8xf32> -> vector<8x1x128xf32>
    %38 = math.tanh %23 : vector<8x16x128xf32>
    %39 = vector.broadcast %37 : vector<8x1x128xf32> to vector<8x16x128xf32>
    %40 = arith.addf %23, %39 : vector<8x16x128xf32>
    %cst_10 = arith.constant 0.000000e+00 : f32
    %41 = vector.broadcast %cst_10 : f32 to vector<8x16x128xf32>
    %42 = arith.maximumf %40, %41 : vector<8x16x128xf32>
    %43 = vector.extract_strided_slice %42 {offsets = [0, 0, 8], sizes = [8, 16, 120], strides = [1, 1, 1]} : vector<8x16x128xf32> to vector<8x16x120xf32>
    %44 = vector.extract_strided_slice %42 {offsets = [0, 0, 0], sizes = [8, 16, 8], strides = [1, 1, 1]} : vector<8x16x128xf32> to vector<8x16x8xf32>
    %45 = tpu.concatenate %43, %44 in 2 : vector<8x16x120xf32>, vector<8x16x8xf32> -> vector<8x16x128xf32>
    %46 = arith.mulf %38, %45 : vector<8x16x128xf32>
    %cst_11 = arith.constant dense<0xFF800000> : vector<8x128xf32>
    %47 = vector.multi_reduction <maximumf>, %46, %cst_11 [1] : vector<8x16x128xf32> to vector<8x128xf32>
    %c0_12 = arith.constant 0 : index
    %c0_13 = arith.constant 0 : index
    %48 = vector.load %arg5[%c0_12, %c0_13] : memref<128x128xf32, #tpu.memory_space<vmem>>, vector<128x128xf32>
    %cst_14 = arith.constant dense<0.000000e+00> : vector<8x128xf32>
    %49 = tpu.matmul %47, %48, %cst_14 {dimension_numbers = #tpu.dot_dimension_numbers<[1], [0], [0], [1], [0, 0, 1, 1], [], []>} : vector<8x128xf32>, vector<128x128xf32>, vector<8x128xf32> -> vector<8x128xf32>
    %c0_15 = arith.constant 0 : index
    %c0_16 = arith.constant 0 : index
    %50 = vector.load %arg6[%c0_15, %c0_16] : memref<1x128xf32, #tpu.memory_space<vmem>>, vector<1x128xf32>
    %51 = vector.broadcast %50 : vector<1x128xf32> to vector<8x128xf32>
    %52 = arith.addf %49, %51 : vector<8x128xf32>
    %c0_17 = arith.constant 0 : index
    %c0_18 = arith.constant 0 : index
    %53 = vector.load %arg7[%c0_17, %c0_18] : memref<8x128xf32, #tpu.memory_space<vmem>>, vector<8x128xf32>
    tpu.vector_store %arg7[%c0_17, %c0_18], %52 {strides = array<i32>} : memref<8x128xf32, #tpu.memory_space<vmem>>, vector<8x128xf32>,
    return
  }
  func.func @transform_0(%arg0: i32) -> (i32, i32) {
    %c0_i32 = arith.constant 0 : i32
    %c0_i32_0 = arith.constant 0 : i32
    return %arg0, %c0_i32 : i32, i32
  }
  func.func @transform_1(%arg0: i32) -> (i32, i32) {
    %c0_i32 = arith.constant 0 : i32
    %c0_i32_0 = arith.constant 0 : i32
    %c0_i32_1 = arith.constant 0 : i32
    return %c0_i32, %c0_i32_0 : i32, i32
  }
  func.func @transform_2(%arg0: i32) -> (i32, i32) {
    %c0_i32 = arith.constant 0 : i32
    %c0_i32_0 = arith.constant 0 : i32
    %c0_i32_1 = arith.constant 0 : i32
    return %c0_i32, %c0_i32_0 : i32, i32
  }
  func.func @transform_3(%arg0: i32) -> (i32, i32) {
    %c0_i32 = arith.constant 0 : i32
    %c0_i32_0 = arith.constant 0 : i32
    %c0_i32_1 = arith.constant 0 : i32
    return %c0_i32, %c0_i32_0 : i32, i32
  }
  func.func @transform_4(%arg0: i32) -> (i32, i32) {
    %c0_i32 = arith.constant 0 : i32
    %c0_i32_0 = arith.constant 0 : i32
    %c0_i32_1 = arith.constant 0 : i32
    return %c0_i32, %c0_i32_0 : i32, i32
  }
  func.func @transform_5(%arg0: i32) -> (i32, i32) {
    %c0_i32 = arith.constant 0 : i32
    %c0_i32_0 = arith.constant 0 : i32
    %c0_i32_1 = arith.constant 0 : i32
    return %c0_i32, %c0_i32_0 : i32, i32
  }
  func.func @transform_6(%arg0: i32) -> (i32, i32) {
    %c0_i32 = arith.constant 0 : i32
    %c0_i32_0 = arith.constant 0 : i32
    return %arg0, %c0_i32 : i32, i32
  }
}

</mosaic_0001>

<llo_original>
// kernel: tpu_custom_call.1
$region0: #{tpu_custom_call.1}
  #allocation0 [shape = 'u32[]', space=smem, size = 0x4, offset = 0x4, fixed_abs, tag = 'smem constant byte address 0x4 - core index']
  #allocation1 [shape = 'u32[144,128]{1,0:T(1,128)}', space=vmem, size = 0x12000, scoped, tag = 'internal scratch']
  %s0 = inlined_call_operand.vmem [shape: s32[320,1], index: 0, kind: input, shape index: {}]
  %s1 = inlined_call_operand.vmem [shape: f32[128,32], index: 1, kind: input, shape index: {}]
  %s2 = inlined_call_operand.vmem [shape: f32[32,640], index: 2, kind: input, shape index: {}]
  %s3 = inlined_call_operand.vmem [shape: f32[1,128], index: 3, kind: input, shape index: {}]
  %s4 = inlined_call_operand.vmem [shape: f32[128,128], index: 4, kind: input, shape index: {}]
  %s5 = inlined_call_operand.vmem [shape: f32[1,128], index: 5, kind: input, shape index: {}]
  %s6 = inlined_call_operand.hbm [shape: f32[8,128], index: 6, kind: output, shape index: {}]
  %s7 = sld [smem:[#allocation0]]
  $region34: #{tpu_custom_call.1} parent=0
    _
  %s9 = ssub.s32 1, %s7
  %s10 = scalar_select 0, %s9, %s7
  $region1: #{tpu_custom_call.1} parent=0
    #allocation2 [shape = 'u8[4096]{0}', space=vmem, size = 0x1000, scoped, tag = 'output window, operand 0, single buffered']
    #allocation3 [shape = 's32[1]{0}', space=sflag, size = 0x4, scoped, tag = 'scoped memory for tpu_custom_call.1']
    %11 = vsyncpa [#allocation3], 0
    // Predicated region
    $region2: #{tpu_custom_call.1} parent=1 // pred_check
      _
    $region3: #{tpu_custom_call.1} parent=1 // pred_check_branch
      %13 = sbr.rel (0) target = $region5
    $region4: #{tpu_custom_call.1} parent=1 // pred_region
      _
    $region5: #{tpu_custom_call.1} parent=1 // pred_fallthru
      _
    // Predicated region
    $region6: #{tpu_custom_call.1} parent=1 // pred_check
      _
    $region7: #{tpu_custom_call.1} parent=1 // pred_check_branch
      %15 = sbr.rel (0) target = $region9
    $region8: #{tpu_custom_call.1} parent=1 // pred_region
      _
    $region9: #{tpu_custom_call.1} parent=1 // pred_fallthru
      _
    // Predicated region
    $region10: #{tpu_custom_call.1} parent=1 // pred_check
      _
    $region11: #{tpu_custom_call.1} parent=1 // pred_check_branch
      %17 = sbr.rel (0) target = $region13
    $region12: #{tpu_custom_call.1} parent=1 // pred_region
      _
    $region13: #{tpu_custom_call.1} parent=1 // pred_fallthru
      _
    // Predicated region
    $region14: #{tpu_custom_call.1} parent=1 // pred_check
      _
    $region15: #{tpu_custom_call.1} parent=1 // pred_check_branch
      %19 = sbr.rel (0) target = $region17
    $region16: #{tpu_custom_call.1} parent=1 // pred_region
      _
    $region17: #{tpu_custom_call.1} parent=1 // pred_fallthru
      _
    // Predicated region
    $region18: #{tpu_custom_call.1} parent=1 // pred_check
      _
    $region19: #{tpu_custom_call.1} parent=1 // pred_check_branch
      %21 = sbr.rel (0) target = $region21
    $region20: #{tpu_custom_call.1} parent=1 // pred_region
      _
    $region21: #{tpu_custom_call.1} parent=1 // pred_fallthru
      _
    // Predicated region
    $region22: #{tpu_custom_call.1} parent=1 // pred_check
      _
    $region23: #{tpu_custom_call.1} parent=1 // pred_check_branch
      %23 = sbr.rel (0) target = $region25
    $region24: #{tpu_custom_call.1} parent=1 // pred_region
      _
    $region25: #{tpu_custom_call.1} parent=1 // pred_fallthru
      _
    %v24 = vld [vmem:[%s0] sm:$0xff]
    %v25 = vld [vmem:[%s0 + $0x8] sm:$0xff]
    %v26 = vld [vmem:[%s0 + $0x10] sm:$0xff]
    %v27 = vld [vmem:[%s0 + $0x18] sm:$0xff]
    %v28 = vld [vmem:[%s0 + $0x20] sm:$0xff]
    %v29 = vld [vmem:[%s0 + $0x28] sm:$0xff]
    %v30 = vld [vmem:[%s0 + $0x30] sm:$0xff]
    %v31 = vld [vmem:[%s0 + $0x38] sm:$0xff]
    %v32 = vld [vmem:[%s0 + $0x40] sm:$0xff]
    %v33 = vld [vmem:[%s0 + $0x48] sm:$0xff]
    %v34 = vld [vmem:[%s0 + $0x50] sm:$0xff]
    %v35 = vld [vmem:[%s0 + $0x58] sm:$0xff]
    %v36 = vld [vmem:[%s0 + $0x60] sm:$0xff]
    %v37 = vld [vmem:[%s0 + $0x68] sm:$0xff]
    %v38 = vld [vmem:[%s0 + $0x70] sm:$0xff]
    %v39 = vld [vmem:[%s0 + $0x78] sm:$0xff]
    %v40 = vld [vmem:[%s0 + $0x80] sm:$0xff]
    %v41 = vld [vmem:[%s0 + $0x88] sm:$0xff]
    %v42 = vld [vmem:[%s0 + $0x90] sm:$0xff]
    %v43 = vld [vmem:[%s0 + $0x98] sm:$0xff]
    %v44 = vld [vmem:[%s0 + $0xa0] sm:$0xff]
    %v45 = vld [vmem:[%s0 + $0xa8] sm:$0xff]
    %v46 = vld [vmem:[%s0 + $0xb0] sm:$0xff]
    %v47 = vld [vmem:[%s0 + $0xb8] sm:$0xff]
    %v48 = vld [vmem:[%s0 + $0xc0] sm:$0xff]
    %v49 = vld [vmem:[%s0 + $0xc8] sm:$0xff]
    %v50 = vld [vmem:[%s0 + $0xd0] sm:$0xff]
    %v51 = vld [vmem:[%s0 + $0xd8] sm:$0xff]
    %v52 = vld [vmem:[%s0 + $0xe0] sm:$0xff]
    %v53 = vld [vmem:[%s0 + $0xe8] sm:$0xff]
    %v54 = vld [vmem:[%s0 + $0xf0] sm:$0xff]
    %v55 = vld [vmem:[%s0 + $0xf8] sm:$0xff]
    %v56 = vld [vmem:[%s0 + $0x100] sm:$0xff]
    %v57 = vld [vmem:[%s0 + $0x108] sm:$0xff]
    %v58 = vld [vmem:[%s0 + $0x110] sm:$0xff]
    %v59 = vld [vmem:[%s0 + $0x118] sm:$0xff]
    %v60 = vld [vmem:[%s0 + $0x120] sm:$0xff]
    %v61 = vld [vmem:[%s0 + $0x128] sm:$0xff]
    %v62 = vld [vmem:[%s0 + $0x130] sm:$0xff]
    %v63 = vld [vmem:[%s0 + $0x138] sm:$0xff]
    %v64 = vlaneseq
    %v65 = vand.u32 %v64, 127
    %66 = vset.pattern.permute.xlu0 0
    %67 = vperm.xlu0 %66, %v24
    %v68 = vpop.permute.xlu0 %67
    %69 = vset.pattern.permute.xlu0 0
    %70 = vperm.xlu0 %69, %v25
    %v71 = vpop.permute.xlu0 %70
    %72 = vset.pattern.permute.xlu0 0
    %73 = vperm.xlu0 %72, %v26
    %v74 = vpop.permute.xlu0 %73
    %75 = vset.pattern.permute.xlu0 0
    %76 = vperm.xlu0 %75, %v27
    %v77 = vpop.permute.xlu0 %76
    %78 = vset.pattern.permute.xlu0 0
    %79 = vperm.xlu0 %78, %v28
    %v80 = vpop.permute.xlu0 %79
    %81 = vset.pattern.permute.xlu0 0
    %82 = vperm.xlu0 %81, %v29
    %v83 = vpop.permute.xlu0 %82
    %84 = vset.pattern.permute.xlu0 0
    %85 = vperm.xlu0 %84, %v30
    %v86 = vpop.permute.xlu0 %85
    %87 = vset.pattern.permute.xlu0 0
    %88 = vperm.xlu0 %87, %v31
    %v89 = vpop.permute.xlu0 %88
    %90 = vset.pattern.permute.xlu0 0
    %91 = vperm.xlu0 %90, %v32
    %v92 = vpop.permute.xlu0 %91
    %93 = vset.pattern.permute.xlu0 0
    %94 = vperm.xlu0 %93, %v33
    %v95 = vpop.permute.xlu0 %94
    %96 = vset.pattern.permute.xlu0 0
    %97 = vperm.xlu0 %96, %v34
    %v98 = vpop.permute.xlu0 %97
    %99 = vset.pattern.permute.xlu0 0
    %100 = vperm.xlu0 %99, %v35
    %v101 = vpop.permute.xlu0 %100
    %102 = vset.pattern.permute.xlu0 0
    %103 = vperm.xlu0 %102, %v36
    %v104 = vpop.permute.xlu0 %103
    %105 = vset.pattern.permute.xlu0 0
    %106 = vperm.xlu0 %105, %v37
    %v107 = vpop.permute.xlu0 %106
    %108 = vset.pattern.permute.xlu0 0
    %109 = vperm.xlu0 %108, %v38
    %v110 = vpop.permute.xlu0 %109
    %111 = vset.pattern.permute.xlu0 0
    %112 = vperm.xlu0 %111, %v39
    %v113 = vpop.permute.xlu0 %112
    %114 = vset.pattern.permute.xlu0 0
    %115 = vperm.xlu0 %114, %v40
    %v116 = vpop.permute.xlu0 %115
    %117 = vset.pattern.permute.xlu0 0
    %118 = vperm.xlu0 %117, %v41
    %v119 = vpop.permute.xlu0 %118
    %120 = vset.pattern.permute.xlu0 0
    %121 = vperm.xlu0 %120, %v42
    %v122 = vpop.permute.xlu0 %121
    %123 = vset.pattern.permute.xlu0 0
    %124 = vperm.xlu0 %123, %v43
    %v125 = vpop.permute.xlu0 %124
    %126 = vset.pattern.permute.xlu0 0
    %127 = vperm.xlu0 %126, %v44
    %v128 = vpop.permute.xlu0 %127
    %129 = vset.pattern.permute.xlu0 0
    %130 = vperm.xlu0 %129, %v45
    %v131 = vpop.permute.xlu0 %130
    %132 = vset.pattern.permute.xlu0 0
    %133 = vperm.xlu0 %132, %v46
    %v134 = vpop.permute.xlu0 %133
    %135 = vset.pattern.permute.xlu0 0
    %136 = vperm.xlu0 %135, %v47
    %v137 = vpop.permute.xlu0 %136
    %138 = vset.pattern.permute.xlu0 0
    %139 = vperm.xlu0 %138, %v48
    %v140 = vpop.permute.xlu0 %139
    %141 = vset.pattern.permute.xlu0 0
    %142 = vperm.xlu0 %141, %v49
    %v143 = vpop.permute.xlu0 %142
    %144 = vset.pattern.permute.xlu0 0
    %145 = vperm.xlu0 %144, %v50
    %v146 = vpop.permute.xlu0 %145
    %147 = vset.pattern.permute.xlu0 0
    %148 = vperm.xlu0 %147, %v51
    %v149 = vpop.permute.xlu0 %148
    %150 = vset.pattern.permute.xlu0 0
    %151 = vperm.xlu0 %150, %v52
    %v152 = vpop.permute.xlu0 %151
    %153 = vset.pattern.permute.xlu0 0
    %154 = vperm.xlu0 %153, %v53
    %v155 = vpop.permute.xlu0 %154
    %156 = vset.pattern.permute.xlu0 0
    %157 = vperm.xlu0 %156, %v54
    %v158 = vpop.permute.xlu0 %157
    %159 = vset.pattern.permute.xlu0 0
    %160 = vperm.xlu0 %159, %v55
    %v161 = vpop.permute.xlu0 %160
    %162 = vset.pattern.permute.xlu0 0
    %163 = vperm.xlu0 %162, %v56
    %v164 = vpop.permute.xlu0 %163
    %165 = vset.pattern.permute.xlu0 0
    %166 = vperm.xlu0 %165, %v57
    %v167 = vpop.permute.xlu0 %166
    %168 = vset.pattern.permute.xlu0 0
    %169 = vperm.xlu0 %168, %v58
    %v170 = vpop.permute.xlu0 %169
    %171 = vset.pattern.permute.xlu0 0
    %172 = vperm.xlu0 %171, %v59
    %v173 = vpop.permute.xlu0 %172
    %174 = vset.pattern.permute.xlu0 0
    %175 = vperm.xlu0 %174, %v60
    %v176 = vpop.permute.xlu0 %175
    %177 = vset.pattern.permute.xlu0 0
    %178 = vperm.xlu0 %177, %v61
    %v179 = vpop.permute.xlu0 %178
    %180 = vset.pattern.permute.xlu0 0
    %181 = vperm.xlu0 %180, %v62
    %v182 = vpop.permute.xlu0 %181
    %183 = vset.pattern.permute.xlu0 0
    %184 = vperm.xlu0 %183, %v63
    %v185 = vpop.permute.xlu0 %184
    %vm186 = vcmp.eq.s32.totalorder %v65, %v68
    %vm187 = vcmp.eq.s32.totalorder %v65, %v71
    %vm188 = vcmp.eq.s32.totalorder %v65, %v74
    %vm189 = vcmp.eq.s32.totalorder %v65, %v77
    %vm190 = vcmp.eq.s32.totalorder %v65, %v80
    %vm191 = vcmp.eq.s32.totalorder %v65, %v83
    %vm192 = vcmp.eq.s32.totalorder %v65, %v86
    %vm193 = vcmp.eq.s32.totalorder %v65, %v89
    %vm194 = vcmp.eq.s32.totalorder %v65, %v92
    %vm195 = vcmp.eq.s32.totalorder %v65, %v95
    %vm196 = vcmp.eq.s32.totalorder %v65, %v98
    %vm197 = vcmp.eq.s32.totalorder %v65, %v101
    %vm198 = vcmp.eq.s32.totalorder %v65, %v104
    %vm199 = vcmp.eq.s32.totalorder %v65, %v107
    %vm200 = vcmp.eq.s32.totalorder %v65, %v110
    %vm201 = vcmp.eq.s32.totalorder %v65, %v113
    %vm202 = vcmp.eq.s32.totalorder %v65, %v116
    %vm203 = vcmp.eq.s32.totalorder %v65, %v119
    %vm204 = vcmp.eq.s32.totalorder %v65, %v122
    %vm205 = vcmp.eq.s32.totalorder %v65, %v125
    %vm206 = vcmp.eq.s32.totalorder %v65, %v128
    %vm207 = vcmp.eq.s32.totalorder %v65, %v131
    %vm208 = vcmp.eq.s32.totalorder %v65, %v134
    %vm209 = vcmp.eq.s32.totalorder %v65, %v137
    %vm210 = vcmp.eq.s32.totalorder %v65, %v140
    %vm211 = vcmp.eq.s32.totalorder %v65, %v143
    %vm212 = vcmp.eq.s32.totalorder %v65, %v146
    %vm213 = vcmp.eq.s32.totalorder %v65, %v149
    %vm214 = vcmp.eq.s32.totalorder %v65, %v152
    %vm215 = vcmp.eq.s32.totalorder %v65, %v155
    %vm216 = vcmp.eq.s32.totalorder %v65, %v158
    %vm217 = vcmp.eq.s32.totalorder %v65, %v161
    %vm218 = vcmp.eq.s32.totalorder %v65, %v164
    %vm219 = vcmp.eq.s32.totalorder %v65, %v167
    %vm220 = vcmp.eq.s32.totalorder %v65, %v170
    %vm221 = vcmp.eq.s32.totalorder %v65, %v173
    %vm222 = vcmp.eq.s32.totalorder %v65, %v176
    %vm223 = vcmp.eq.s32.totalorder %v65, %v179
    %vm224 = vcmp.eq.s32.totalorder %v65, %v182
    %vm225 = vcmp.eq.s32.totalorder %v65, %v185
    %v226 = vsel %vm186, 1, 0
    %v227 = vsel %vm187, 1, 0
    %v228 = vsel %vm188, 1, 0
    %v229 = vsel %vm189, 1, 0
    %v230 = vsel %vm190, 1, 0
    %v231 = vsel %vm191, 1, 0
    %v232 = vsel %vm192, 1, 0
    %v233 = vsel %vm193, 1, 0
    %v234 = vsel %vm194, 1, 0
    %v235 = vsel %vm195, 1, 0
    %v236 = vsel %vm196, 1, 0
    %v237 = vsel %vm197, 1, 0
    %v238 = vsel %vm198, 1, 0
    %v239 = vsel %vm199, 1, 0
    %v240 = vsel %vm200, 1, 0
    %v241 = vsel %vm201, 1, 0
    %v242 = vsel %vm202, 1, 0
    %v243 = vsel %vm203, 1, 0
    %v244 = vsel %vm204, 1, 0
    %v245 = vsel %vm205, 1, 0
    %v246 = vsel %vm206, 1, 0
    %v247 = vsel %vm207, 1, 0
    %v248 = vsel %vm208, 1, 0
    %v249 = vsel %vm209, 1, 0
    %v250 = vsel %vm210, 1, 0
    %v251 = vsel %vm211, 1, 0
    %v252 = vsel %vm212, 1, 0
    %v253 = vsel %vm213, 1, 0
    %v254 = vsel %vm214, 1, 0
    %v255 = vsel %vm215, 1, 0
    %v256 = vsel %vm216, 1, 0
    %v257 = vsel %vm217, 1, 0
    %v258 = vsel %vm218, 1, 0
    %v259 = vsel %vm219, 1, 0
    %v260 = vsel %vm220, 1, 0
    %v261 = vsel %vm221, 1, 0
    %v262 = vsel %vm222, 1, 0
    %v263 = vsel %vm223, 1, 0
    %v264 = vsel %vm224, 1, 0
    %v265 = vsel %vm225, 1, 0
    %v266 = vcvt.s32.f32 %v226
    %v267 = vcvt.s32.f32 %v227
    %v268 = vcvt.s32.f32 %v228
    %v269 = vcvt.s32.f32 %v229
    %v270 = vcvt.s32.f32 %v230
    %v271 = vcvt.s32.f32 %v231
    %v272 = vcvt.s32.f32 %v232
    %v273 = vcvt.s32.f32 %v233
    %v274 = vcvt.s32.f32 %v234
    %v275 = vcvt.s32.f32 %v235
    %v276 = vcvt.s32.f32 %v236
    %v277 = vcvt.s32.f32 %v237
    %v278 = vcvt.s32.f32 %v238
    %v279 = vcvt.s32.f32 %v239
    %v280 = vcvt.s32.f32 %v240
    %v281 = vcvt.s32.f32 %v241
    %v282 = vcvt.s32.f32 %v242
    %v283 = vcvt.s32.f32 %v243
    %v284 = vcvt.s32.f32 %v244
    %v285 = vcvt.s32.f32 %v245
    %v286 = vcvt.s32.f32 %v246
    %v287 = vcvt.s32.f32 %v247
    %v288 = vcvt.s32.f32 %v248
    %v289 = vcvt.s32.f32 %v249
    %v290 = vcvt.s32.f32 %v250
    %v291 = vcvt.s32.f32 %v251
    %v292 = vcvt.s32.f32 %v252
    %v293 = vcvt.s32.f32 %v253
    %v294 = vcvt.s32.f32 %v254
    %v295 = vcvt.s32.f32 %v255
    %v296 = vcvt.s32.f32 %v256
    %v297 = vcvt.s32.f32 %v257
    %v298 = vcvt.s32.f32 %v258
    %v299 = vcvt.s32.f32 %v259
    %v300 = vcvt.s32.f32 %v260
    %v301 = vcvt.s32.f32 %v261
    %v302 = vcvt.s32.f32 %v262
    %v303 = vcvt.s32.f32 %v263
    %v304 = vcvt.s32.f32 %v264
    %v305 = vcvt.s32.f32 %v265
    %v306 = vld [vmem:[%s1] sm:$0xff]
    %v307 = vld [vmem:[%s1 + $0x8] sm:$0xff]
    %v308 = vld [vmem:[%s1 + $0x10] sm:$0xff]
    %v309 = vld [vmem:[%s1 + $0x18] sm:$0xff]
    %v310 = vld [vmem:[%s1 + $0x20] sm:$0xff]
    %v311 = vld [vmem:[%s1 + $0x28] sm:$0xff]
    %v312 = vld [vmem:[%s1 + $0x30] sm:$0xff]
    %v313 = vld [vmem:[%s1 + $0x38] sm:$0xff]
    %v314 = vld [vmem:[%s1 + $0x40] sm:$0xff]
    %v315 = vld [vmem:[%s1 + $0x48] sm:$0xff]
    %v316 = vld [vmem:[%s1 + $0x50] sm:$0xff]
    %v317 = vld [vmem:[%s1 + $0x58] sm:$0xff]
    %v318 = vld [vmem:[%s1 + $0x60] sm:$0xff]
    %v319 = vld [vmem:[%s1 + $0x68] sm:$0xff]
    %v320 = vld [vmem:[%s1 + $0x70] sm:$0xff]
    %v321 = vld [vmem:[%s1 + $0x78] sm:$0xff]
    %322 = vmatprep.subr.mxu0 0.0
    %323 = vmatpush1.msra.mxu0 %v306
    %324 = vmatprep.subr.mxu0 0.0
    %325 = vmatpush1.msra.mxu0 %v307
    %326 = vmatprep.subr.mxu0 0.0
    %327 = vmatpush1.msra.mxu0 %v308
    %328 = vmatprep.subr.mxu0 0.0
    %329 = vmatpush1.msra.mxu0 %v309
    %330 = vmatprep.subr.mxu0 0.0
    %331 = vmatpush1.msra.mxu0 %v310
    %332 = vmatprep.subr.mxu0 0.0
    %333 = vmatpush1.msra.mxu0 %v311
    %334 = vmatprep.subr.mxu0 0.0
    %335 = vmatpush1.msra.mxu0 %v312
    %336 = vmatprep.subr.mxu0 0.0
    %337 = vmatpush1.msra.mxu0 %v313
    %338 = vmatprep.subr.mxu0 0.0
    %339 = vmatpush1.msra.mxu0 %v314
    %340 = vmatprep.subr.mxu0 0.0
    %341 = vmatpush1.msra.mxu0 %v315
    %342 = vmatprep.subr.mxu0 0.0
    %343 = vmatpush1.msra.mxu0 %v316
    %344 = vmatprep.subr.mxu0 0.0
    %345 = vmatpush1.msra.mxu0 %v317
    %346 = vmatprep.subr.mxu0 0.0
    %347 = vmatpush1.msra.mxu0 %v318
    %348 = vmatprep.subr.mxu0 0.0
    %349 = vmatpush1.msra.mxu0 %v319
    %350 = vmatprep.subr.mxu0 0.0
    %351 = vmatpush1.msra.mxu0 %v320
    %352 = vmatprep.subr.mxu0 0.0
    %353 = vmatpush1.msra.mxu0 %v321
    %354 = vmatprep.subr.mxu0 0.0
    %355 = vmatpush1.msra.mxu0 0.0
    %356 = vmatprep.subr.mxu0 0.0
    %357 = vmatpush1.msra.mxu0 0.0
    %358 = vmatprep.subr.mxu0 0.0
    %359 = vmatpush1.msra.mxu0 0.0
    %360 = vmatprep.subr.mxu0 0.0
    %361 = vmatpush1.msra.mxu0 0.0
    %362 = vmatprep.subr.mxu0 0.0
    %363 = vmatpush1.msra.mxu0 0.0
    %364 = vmatprep.subr.mxu0 0.0
    %365 = vmatpush1.msra.mxu0 0.0
    %366 = vmatprep.subr.mxu0 0.0
    %367 = vmatpush1.msra.mxu0 0.0
    %368 = vmatprep.subr.mxu0 0.0
    %369 = vmatpush1.msra.mxu0 0.0
    %370 = vmatprep.subr.mxu0 0.0
    %371 = vmatpush1.msra.mxu0 0.0
    %372 = vmatprep.subr.mxu0 0.0
    %373 = vmatpush1.msra.mxu0 0.0
    %374 = vmatprep.subr.mxu0 0.0
    %375 = vmatpush1.msra.mxu0 0.0
    %376 = vmatprep.subr.mxu0 0.0
    %377 = vmatpush1.msra.mxu0 0.0
    %378 = vmatprep.subr.mxu0 0.0
    %379 = vmatpush1.msra.mxu0 0.0
    %380 = vmatprep.subr.mxu0 0.0
    %381 = vmatpush1.msra.mxu0 0.0
    %382 = vmatprep.subr.mxu0 0.0
    %383 = vmatpush1.msra.mxu0 0.0
    %384 = vmatprep.subr.mxu0 0.0
    %385 = vmatpush1.msra.mxu0 0.0
    %386 = vmatprep.mubr.f32.mxu0 0.0
    %387 = vmatmul.mubr.f32.gmra.mrb[0].mxu0 %v266
    %v388 = vpop.f32.mrb[0].mxu0
    %v389 = vadd.f32 0.0, %v388
    %v390 = vpop.f32.mrb[0].mxu0
    %391 = vmatprep.mubr.f32.mxu0 0.0
    %392 = vmatmul.mubr.f32.gmra.mrb[0].mxu0 %v267
    %v393 = vpop.f32.mrb[0].mxu0
    %v394 = vadd.f32 0.0, %v393
    %v395 = vpop.f32.mrb[0].mxu0
    %396 = vmatprep.mubr.f32.mxu0 0.0
    %397 = vmatmul.mubr.f32.gmra.mrb[0].mxu0 %v268
    %v398 = vpop.f32.mrb[0].mxu0
    %v399 = vadd.f32 0.0, %v398
    %v400 = vpop.f32.mrb[0].mxu0
    %401 = vmatprep.mubr.f32.mxu0 0.0
    %402 = vmatmul.mubr.f32.gmra.mrb[0].mxu0 %v269
    %v403 = vpop.f32.mrb[0].mxu0
    %v404 = vadd.f32 0.0, %v403
    %v405 = vpop.f32.mrb[0].mxu0
    %406 = vmatprep.mubr.f32.mxu0 0.0
    %407 = vmatmul.mubr.f32.gmra.mrb[0].mxu0 %v270
    %v408 = vpop.f32.mrb[0].mxu0
    %v409 = vadd.f32 0.0, %v408
    %v410 = vpop.f32.mrb[0].mxu0
    %411 = vmatprep.mubr.f32.mxu0 0.0
    %412 = vmatmul.mubr.f32.gmra.mrb[0].mxu0 %v271
    %v413 = vpop.f32.mrb[0].mxu0
    %v414 = vadd.f32 0.0, %v413
    %v415 = vpop.f32.mrb[0].mxu0
    %416 = vmatprep.mubr.f32.mxu0 0.0
    %417 = vmatmul.mubr.f32.gmra.mrb[0].mxu0 %v272
    %v418 = vpop.f32.mrb[0].mxu0
    %v419 = vadd.f32 0.0, %v418
    %v420 = vpop.f32.mrb[0].mxu0
    %421 = vmatprep.mubr.f32.mxu0 0.0
    %422 = vmatmul.mubr.f32.gmra.mrb[0].mxu0 %v273
    %v423 = vpop.f32.mrb[0].mxu0
    %v424 = vadd.f32 0.0, %v423
    %v425 = vpop.f32.mrb[0].mxu0
    %426 = vmatprep.mubr.f32.mxu0 0.0
    %427 = vmatmul.mubr.f32.gmra.mrb[0].mxu0 %v274
    %v428 = vpop.f32.mrb[0].mxu0
    %v429 = vadd.f32 0.0, %v428
    %v430 = vpop.f32.mrb[0].mxu0
    %431 = vmatprep.mubr.f32.mxu0 0.0
    %432 = vmatmul.mubr.f32.gmra.mrb[0].mxu0 %v275
    %v433 = vpop.f32.mrb[0].mxu0
    %v434 = vadd.f32 0.0, %v433
    %v435 = vpop.f32.mrb[0].mxu0
    %436 = vmatprep.mubr.f32.mxu0 0.0
    %437 = vmatmul.mubr.f32.gmra.mrb[0].mxu0 %v276
    %v438 = vpop.f32.mrb[0].mxu0
    %v439 = vadd.f32 0.0, %v438
    %v440 = vpop.f32.mrb[0].mxu0
    %441 = vmatprep.mubr.f32.mxu0 0.0
    %442 = vmatmul.mubr.f32.gmra.mrb[0].mxu0 %v277
    %v443 = vpop.f32.mrb[0].mxu0
    %v444 = vadd.f32 0.0, %v443
    %v445 = vpop.f32.mrb[0].mxu0
    %446 = vmatprep.mubr.f32.mxu0 0.0
    %447 = vmatmul.mubr.f32.gmra.mrb[0].mxu0 %v278
    %v448 = vpop.f32.mrb[0].mxu0
    %v449 = vadd.f32 0.0, %v448
    %v450 = vpop.f32.mrb[0].mxu0
    %451 = vmatprep.mubr.f32.mxu0 0.0
    %452 = vmatmul.mubr.f32.gmra.mrb[0].mxu0 %v279
    %v453 = vpop.f32.mrb[0].mxu0
    %v454 = vadd.f32 0.0, %v453
    %v455 = vpop.f32.mrb[0].mxu0
    %456 = vmatprep.mubr.f32.mxu0 0.0
    %457 = vmatmul.mubr.f32.gmra.mrb[0].mxu0 %v280
    %v458 = vpop.f32.mrb[0].mxu0
    %v459 = vadd.f32 0.0, %v458
    %v460 = vpop.f32.mrb[0].mxu0
    %461 = vmatprep.mubr.f32.mxu0 0.0
    %462 = vmatmul.mubr.f32.gmra.mrb[0].mxu0 %v281
    %v463 = vpop.f32.mrb[0].mxu0
    %v464 = vadd.f32 0.0, %v463
    %v465 = vpop.f32.mrb[0].mxu0
    %466 = vmatprep.mubr.f32.mxu0 0.0
    %467 = vmatmul.mubr.f32.gmra.mrb[0].mxu0 %v282
    %v468 = vpop.f32.mrb[0].mxu0
    %v469 = vadd.f32 0.0, %v468
    %v470 = vpop.f32.mrb[0].mxu0
    %471 = vmatprep.mubr.f32.mxu0 0.0
    %472 = vmatmul.mubr.f32.gmra.mrb[0].mxu0 %v283
    %v473 = vpop.f32.mrb[0].mxu0
    %v474 = vadd.f32 0.0, %v473
    %v475 = vpop.f32.mrb[0].mxu0
    %476 = vmatprep.mubr.f32.mxu0 0.0
    %477 = vmatmul.mubr.f32.gmra.mrb[0].mxu0 %v284
    %v478 = vpop.f32.mrb[0].mxu0
    %v479 = vadd.f32 0.0, %v478
    %v480 = vpop.f32.mrb[0].mxu0
    %481 = vmatprep.mubr.f32.mxu0 0.0
    %482 = vmatmul.mubr.f32.gmra.mrb[0].mxu0 %v285
    %v483 = vpop.f32.mrb[0].mxu0
    %v484 = vadd.f32 0.0, %v483
    %v485 = vpop.f32.mrb[0].mxu0
    %486 = vmatprep.mubr.f32.mxu0 0.0
    %487 = vmatmul.mubr.f32.gmra.mrb[0].mxu0 %v286
    %v488 = vpop.f32.mrb[0].mxu0
    %v489 = vadd.f32 0.0, %v488
    %v490 = vpop.f32.mrb[0].mxu0
    %491 = vmatprep.mubr.f32.mxu0 0.0
    %492 = vmatmul.mubr.f32.gmra.mrb[0].mxu0 %v287
    %v493 = vpop.f32.mrb[0].mxu0
    %v494 = vadd.f32 0.0, %v493
    %v495 = vpop.f32.mrb[0].mxu0
    %496 = vmatprep.mubr.f32.mxu0 0.0
    %497 = vmatmul.mubr.f32.gmra.mrb[0].mxu0 %v288
    %v498 = vpop.f32.mrb[0].mxu0
    %v499 = vadd.f32 0.0, %v498
    %v500 = vpop.f32.mrb[0].mxu0
    %501 = vmatprep.mubr.f32.mxu0 0.0
    %502 = vmatmul.mubr.f32.gmra.mrb[0].mxu0 %v289
    %v503 = vpop.f32.mrb[0].mxu0
    %v504 = vadd.f32 0.0, %v503
    %v505 = vpop.f32.mrb[0].mxu0
    %506 = vmatprep.mubr.f32.mxu0 0.0
    %507 = vmatmul.mubr.f32.gmra.mrb[0].mxu0 %v290
    %v508 = vpop.f32.mrb[0].mxu0
    %v509 = vadd.f32 0.0, %v508
    %v510 = vpop.f32.mrb[0].mxu0
    %511 = vmatprep.mubr.f32.mxu0 0.0
    %512 = vmatmul.mubr.f32.gmra.mrb[0].mxu0 %v291
    %v513 = vpop.f32.mrb[0].mxu0
    %v514 = vadd.f32 0.0, %v513
    %v515 = vpop.f32.mrb[0].mxu0
    %516 = vmatprep.mubr.f32.mxu0 0.0
    %517 = vmatmul.mubr.f32.gmra.mrb[0].mxu0 %v292
    %v518 = vpop.f32.mrb[0].mxu0
    %v519 = vadd.f32 0.0, %v518
    %v520 = vpop.f32.mrb[0].mxu0
    %521 = vmatprep.mubr.f32.mxu0 0.0
    %522 = vmatmul.mubr.f32.gmra.mrb[0].mxu0 %v293
    %v523 = vpop.f32.mrb[0].mxu0
    %v524 = vadd.f32 0.0, %v523
    %v525 = vpop.f32.mrb[0].mxu0
    %526 = vmatprep.mubr.f32.mxu0 0.0
    %527 = vmatmul.mubr.f32.gmra.mrb[0].mxu0 %v294
    %v528 = vpop.f32.mrb[0].mxu0
    %v529 = vadd.f32 0.0, %v528
    %v530 = vpop.f32.mrb[0].mxu0
    %531 = vmatprep.mubr.f32.mxu0 0.0
    %532 = vmatmul.mubr.f32.gmra.mrb[0].mxu0 %v295
    %v533 = vpop.f32.mrb[0].mxu0
    %v534 = vadd.f32 0.0, %v533
    %v535 = vpop.f32.mrb[0].mxu0
    %536 = vmatprep.mubr.f32.mxu0 0.0
    %537 = vmatmul.mubr.f32.gmra.mrb[0].mxu0 %v296
    %v538 = vpop.f32.mrb[0].mxu0
    %v539 = vadd.f32 0.0, %v538
    %v540 = vpop.f32.mrb[0].mxu0
    %541 = vmatprep.mubr.f32.mxu0 0.0
    %542 = vmatmul.mubr.f32.gmra.mrb[0].mxu0 %v297
    %v543 = vpop.f32.mrb[0].mxu0
    %v544 = vadd.f32 0.0, %v543
    %v545 = vpop.f32.mrb[0].mxu0
    %546 = vmatprep.mubr.f32.mxu0 0.0
    %547 = vmatmul.mubr.f32.gmra.mrb[0].mxu0 %v298
    %v548 = vpop.f32.mrb[0].mxu0
    %v549 = vadd.f32 0.0, %v548
    %v550 = vpop.f32.mrb[0].mxu0
    %551 = vmatprep.mubr.f32.mxu0 0.0
    %552 = vmatmul.mubr.f32.gmra.mrb[0].mxu0 %v299
    %v553 = vpop.f32.mrb[0].mxu0
    %v554 = vadd.f32 0.0, %v553
    %v555 = vpop.f32.mrb[0].mxu0
    %556 = vmatprep.mubr.f32.mxu0 0.0
    %557 = vmatmul.mubr.f32.gmra.mrb[0].mxu0 %v300
    %v558 = vpop.f32.mrb[0].mxu0
    %v559 = vadd.f32 0.0, %v558
    %v560 = vpop.f32.mrb[0].mxu0
    %561 = vmatprep.mubr.f32.mxu0 0.0
    %562 = vmatmul.mubr.f32.gmra.mrb[0].mxu0 %v301
    %v563 = vpop.f32.mrb[0].mxu0
    %v564 = vadd.f32 0.0, %v563
    %v565 = vpop.f32.mrb[0].mxu0
    %566 = vmatprep.mubr.f32.mxu0 0.0
    %567 = vmatmul.mubr.f32.gmra.mrb[0].mxu0 %v302
    %v568 = vpop.f32.mrb[0].mxu0
    %v569 = vadd.f32 0.0, %v568
    %v570 = vpop.f32.mrb[0].mxu0
    %571 = vmatprep.mubr.f32.mxu0 0.0
    %572 = vmatmul.mubr.f32.gmra.mrb[0].mxu0 %v303
    %v573 = vpop.f32.mrb[0].mxu0
    %v574 = vadd.f32 0.0, %v573
    %v575 = vpop.f32.mrb[0].mxu0
    %576 = vmatprep.mubr.f32.mxu0 0.0
    %577 = vmatmul.mubr.f32.gmra.mrb[0].mxu0 %v304
    %v578 = vpop.f32.mrb[0].mxu0
    %v579 = vadd.f32 0.0, %v578
    %v580 = vpop.f32.mrb[0].mxu0
    %581 = vmatprep.mubr.f32.mxu0 0.0
    %582 = vmatmul.mubr.f32.gmra.mrb[0].mxu0 %v305
    %v583 = vpop.f32.mrb[0].mxu0
    %v584 = vadd.f32 0.0, %v583
    %v585 = vpop.f32.mrb[0].mxu0
    %586 = vdwg.mxu0
    %v587 = vld [vmem:[%s2] sm:$0xff]
    %v588 = vld [vmem:[%s2 + $0x8] sm:$0xff]
    %v589 = vld [vmem:[%s2 + $0x10] sm:$0xff]
    %v590 = vld [vmem:[%s2 + $0x18] sm:$0xff]
    %v591 = vld [vmem:[%s2 + $0x20] sm:$0xff]
    %v592 = vld [vmem:[%s2 + $0x28] sm:$0xff]
    %v593 = vld [vmem:[%s2 + $0x30] sm:$0xff]
    %v594 = vld [vmem:[%s2 + $0x38] sm:$0xff]
    %v595 = vld [vmem:[%s2 + $0x40] sm:$0xff]
    %v596 = vld [vmem:[%s2 + $0x48] sm:$0xff]
    %v597 = vld [vmem:[%s2 + $0x50] sm:$0xff]
    %v598 = vld [vmem:[%s2 + $0x58] sm:$0xff]
    %v599 = vld [vmem:[%s2 + $0x60] sm:$0xff]
    %v600 = vld [vmem:[%s2 + $0x68] sm:$0xff]
    %v601 = vld [vmem:[%s2 + $0x70] sm:$0xff]
    %v602 = vld [vmem:[%s2 + $0x78] sm:$0xff]
    %v603 = vld [vmem:[%s2 + $0x80] sm:$0xff]
    %v604 = vld [vmem:[%s2 + $0x88] sm:$0xff]
    %v605 = vld [vmem:[%s2 + $0x90] sm:$0xff]
    %v606 = vld [vmem:[%s2 + $0x98] sm:$0xff]
    %vm607 = vcmask 261120
    %v609 = vsel %vm607, %v389, 0
    %v612 = vsel %vm607, %v394, 0
    %v615 = vsel %vm607, %v399, 0
    %v618 = vsel %vm607, %v404, 0
    %v621 = vsel %vm607, %v409, 0
    %v624 = vsel %vm607, %v414, 0
    %v627 = vsel %vm607, %v419, 0
    %v630 = vsel %vm607, %v424, 0
    %v633 = vsel %vm607, %v429, 0
    %v636 = vsel %vm607, %v434, 0
    %v639 = vsel %vm607, %v439, 0
    %v642 = vsel %vm607, %v444, 0
    %v645 = vsel %vm607, %v449, 0
    %v648 = vsel %vm607, %v454, 0
    %v651 = vsel %vm607, %v459, 0
    %v654 = vsel %vm607, %v464, 0
    %v657 = vsel %vm607, %v469, 0
    %v660 = vsel %vm607, %v474, 0
    %v663 = vsel %vm607, %v479, 0
    %v666 = vsel %vm607, %v484, 0
    %v669 = vsel %vm607, %v489, 0
    %v672 = vsel %vm607, %v494, 0
    %v675 = vsel %vm607, %v499, 0
    %v678 = vsel %vm607, %v504, 0
    %v681 = vsel %vm607, %v509, 0
    %v684 = vsel %vm607, %v514, 0
    %v687 = vsel %vm607, %v519, 0
    %v690 = vsel %vm607, %v524, 0
    %v693 = vsel %vm607, %v529, 0
    %v696 = vsel %vm607, %v534, 0
    %v699 = vsel %vm607, %v539, 0
    %v702 = vsel %vm607, %v544, 0
    %v705 = vsel %vm607, %v549, 0
    %v708 = vsel %vm607, %v554, 0
    %v711 = vsel %vm607, %v559, 0
    %v714 = vsel %vm607, %v564, 0
    %v717 = vsel %vm607, %v569, 0
    %v720 = vsel %vm607, %v574, 0
    %v723 = vsel %vm607, %v579, 0
    %v726 = vsel %vm607, %v584, 0
    %728 = vmatprep.subr.mxu0 %v588
    %729 = vmatpush1.msra.mxu0 %v587
    %730 = vmatprep.subr.mxu0 %v593
    %731 = vmatpush1.msra.mxu0 %v592
    %732 = vmatprep.subr.mxu0 %v598
    %733 = vmatpush1.msra.mxu0 %v597
    %734 = vmatprep.subr.mxu0 %v603
    %735 = vmatpush1.msra.mxu0 %v602
    %736 = vmatprep.subr.mxu0 0.0
    %737 = vmatpush1.msra.mxu0 0.0
    %738 = vmatprep.subr.mxu0 0.0
    %739 = vmatpush1.msra.mxu0 0.0
    %740 = vmatprep.subr.mxu0 0.0
    %741 = vmatpush1.msra.mxu0 0.0
    %742 = vmatprep.subr.mxu0 0.0
    %743 = vmatpush1.msra.mxu0 0.0
    %744 = vmatprep.subr.mxu0 0.0
    %745 = vmatpush1.msra.mxu0 0.0
    %746 = vmatprep.subr.mxu0 0.0
    %747 = vmatpush1.msra.mxu0 0.0
    %748 = vmatprep.subr.mxu0 0.0
    %749 = vmatpush1.msra.mxu0 0.0
    %750 = vmatprep.subr.mxu0 0.0
    %751 = vmatpush1.msra.mxu0 0.0
    %752 = vmatprep.subr.mxu0 0.0
    %753 = vmatpush1.msra.mxu0 0.0
    %754 = vmatprep.subr.mxu0 0.0
    %755 = vmatpush1.msra.mxu0 0.0
    %756 = vmatprep.subr.mxu0 0.0
    %757 = vmatpush1.msra.mxu0 0.0
    %758 = vmatprep.subr.mxu0 0.0
    %759 = vmatpush1.msra.mxu0 0.0
    %760 = vmatprep.subr.mxu0 0.0
    %761 = vmatpush1.msra.mxu0 0.0
    %762 = vmatprep.subr.mxu0 0.0
    %763 = vmatpush1.msra.mxu0 0.0
    %764 = vmatprep.subr.mxu0 0.0
    %765 = vmatpush1.msra.mxu0 0.0
    %766 = vmatprep.subr.mxu0 0.0
    %767 = vmatpush1.msra.mxu0 0.0
    %768 = vmatprep.subr.mxu0 0.0
    %769 = vmatpush1.msra.mxu0 0.0
    %770 = vmatprep.subr.mxu0 0.0
    %771 = vmatpush1.msra.mxu0 0.0
    %772 = vmatprep.subr.mxu0 0.0
    %773 = vmatpush1.msra.mxu0 0.0
    %774 = vmatprep.subr.mxu0 0.0
    %775 = vmatpush1.msra.mxu0 0.0
    %776 = vmatprep.subr.mxu0 0.0
    %777 = vmatpush1.msra.mxu0 0.0
    %778 = vmatprep.subr.mxu0 0.0
    %779 = vmatpush1.msra.mxu0 0.0
    %780 = vmatprep.subr.mxu0 0.0
    %781 = vmatpush1.msra.mxu0 0.0
    %782 = vmatprep.subr.mxu0 0.0
    %783 = vmatpush1.msra.mxu0 0.0
    %784 = vmatprep.subr.mxu0 0.0
    %785 = vmatpush1.msra.mxu0 0.0
    %786 = vmatprep.subr.mxu0 0.0
    %787 = vmatpush1.msra.mxu0 0.0
    %788 = vmatprep.subr.mxu0 0.0
    %789 = vmatpush1.msra.mxu0 0.0
    %790 = vmatprep.subr.mxu0 0.0
    %791 = vmatpush1.msra.mxu0 0.0
    %792 = vmatprep.mubr.f32.mxu0 0.0
    %793 = vmatmul.mubr.f32.gmra.mrb[0].mxu0 %v609
    %v794 = vpop.f32.mrb[0].mxu0
    %v795 = vadd.f32 0.0, %v794
    %v796 = vpop.f32.mrb[0].mxu0
    %v797 = vadd.f32 0.0, %v796
    %798 = vmatprep.mubr.f32.mxu0 0.0
    %799 = vmatmul.mubr.f32.gmra.mrb[0].mxu0 %v612
    %v800 = vpop.f32.mrb[0].mxu0
    %v801 = vadd.f32 0.0, %v800
    %v802 = vpop.f32.mrb[0].mxu0
    %v803 = vadd.f32 0.0, %v802
    %804 = vmatprep.mubr.f32.mxu0 0.0
    %805 = vmatmul.mubr.f32.gmra.mrb[0].mxu0 %v615
    %v806 = vpop.f32.mrb[0].mxu0
    %v807 = vadd.f32 0.0, %v806
    %v808 = vpop.f32.mrb[0].mxu0
    %v809 = vadd.f32 0.0, %v808
    %810 = vmatprep.mubr.f32.mxu0 0.0
    %811 = vmatmul.mubr.f32.gmra.mrb[0].mxu0 %v618
    %v812 = vpop.f32.mrb[0].mxu0
    %v813 = vpop.f32.mrb[0].mxu0
    %814 = vmatprep.mubr.f32.mxu0 0.0
    %815 = vmatmul.mubr.f32.gmra.mrb[0].mxu0 %v621
    %v816 = vpop.f32.mrb[0].mxu0
    %v817 = vpop.f32.mrb[0].mxu0
    %818 = vmatprep.mubr.f32.mxu0 0.0
    %819 = vmatmul.mubr.f32.gmra.mrb[0].mxu0 %v624
    %v820 = vpop.f32.mrb[0].mxu0
    %v821 = vadd.f32 0.0, %v820
    %v822 = vpop.f32.mrb[0].mxu0
    %v823 = vadd.f32 0.0, %v822
    %824 = vmatprep.mubr.f32.mxu0 0.0
    %825 = vmatmul.mubr.f32.gmra.mrb[0].mxu0 %v627
    %v826 = vpop.f32.mrb[0].mxu0
    %v827 = vadd.f32 0.0, %v826
    %v828 = vpop.f32.mrb[0].mxu0
    %v829 = vadd.f32 0.0, %v828
    %830 = vmatprep.mubr.f32.mxu0 0.0
    %831 = vmatmul.mubr.f32.gmra.mrb[0].mxu0 %v630
    %v832 = vpop.f32.mrb[0].mxu0
    %v833 = vadd.f32 0.0, %v832
    %v834 = vpop.f32.mrb[0].mxu0
    %v835 = vadd.f32 0.0, %v834
    %836 = vmatprep.mubr.f32.mxu0 0.0
    %837 = vmatmul.mubr.f32.gmra.mrb[0].mxu0 %v633
    %v838 = vpop.f32.mrb[0].mxu0
    %v839 = vpop.f32.mrb[0].mxu0
    %840 = vmatprep.mubr.f32.mxu0 0.0
    %841 = vmatmul.mubr.f32.gmra.mrb[0].mxu0 %v636
    %v842 = vpop.f32.mrb[0].mxu0
    %v843 = vpop.f32.mrb[0].mxu0
    %844 = vmatprep.mubr.f32.mxu0 0.0
    %845 = vmatmul.mubr.f32.gmra.mrb[0].mxu0 %v639
    %v846 = vpop.f32.mrb[0].mxu0
    %v847 = vadd.f32 0.0, %v846
    %v848 = vpop.f32.mrb[0].mxu0
    %v849 = vadd.f32 0.0, %v848
    %850 = vmatprep.mubr.f32.mxu0 0.0
    %851 = vmatmul.mubr.f32.gmra.mrb[0].mxu0 %v642
    %v852 = vpop.f32.mrb[0].mxu0
    %v853 = vadd.f32 0.0, %v852
    %v854 = vpop.f32.mrb[0].mxu0
    %v855 = vadd.f32 0.0, %v854
    %856 = vmatprep.mubr.f32.mxu0 0.0
    %857 = vmatmul.mubr.f32.gmra.mrb[0].mxu0 %v645
    %v858 = vpop.f32.mrb[0].mxu0
    %v859 = vadd.f32 0.0, %v858
    %v860 = vpop.f32.mrb[0].mxu0
    %v861 = vadd.f32 0.0, %v860
    %862 = vmatprep.mubr.f32.mxu0 0.0
    %863 = vmatmul.mubr.f32.gmra.mrb[0].mxu0 %v648
    %v864 = vpop.f32.mrb[0].mxu0
    %v865 = vpop.f32.mrb[0].mxu0
    %866 = vmatprep.mubr.f32.mxu0 0.0
    %867 = vmatmul.mubr.f32.gmra.mrb[0].mxu0 %v651
    %v868 = vpop.f32.mrb[0].mxu0
    %v869 = vpop.f32.mrb[0].mxu0
    %870 = vmatprep.mubr.f32.mxu0 0.0
    %871 = vmatmul.mubr.f32.gmra.mrb[0].mxu0 %v654
    %v872 = vpop.f32.mrb[0].mxu0
    %v873 = vadd.f32 0.0, %v872
    %v874 = vpop.f32.mrb[0].mxu0
    %v875 = vadd.f32 0.0, %v874
    %876 = vmatprep.mubr.f32.mxu0 0.0
    %877 = vmatmul.mubr.f32.gmra.mrb[0].mxu0 %v657
    %v878 = vpop.f32.mrb[0].mxu0
    %v879 = vadd.f32 0.0, %v878
    %v880 = vpop.f32.mrb[0].mxu0
    %v881 = vadd.f32 0.0, %v880
    %882 = vmatprep.mubr.f32.mxu0 0.0
    %883 = vmatmul.mubr.f32.gmra.mrb[0].mxu0 %v660
    %v884 = vpop.f32.mrb[0].mxu0
    %v885 = vadd.f32 0.0, %v884
    %v886 = vpop.f32.mrb[0].mxu0
    %v887 = vadd.f32 0.0, %v886
    %888 = vmatprep.mubr.f32.mxu0 0.0
    %889 = vmatmul.mubr.f32.gmra.mrb[0].mxu0 %v663
    %v890 = vpop.f32.mrb[0].mxu0
    %v891 = vpop.f32.mrb[0].mxu0
    %892 = vmatprep.mubr.f32.mxu0 0.0
    %893 = vmatmul.mubr.f32.gmra.mrb[0].mxu0 %v666
    %v894 = vpop.f32.mrb[0].mxu0
    %v895 = vpop.f32.mrb[0].mxu0
    %896 = vmatprep.mubr.f32.mxu0 0.0
    %897 = vmatmul.mubr.f32.gmra.mrb[0].mxu0 %v669
    %v898 = vpop.f32.mrb[0].mxu0
    %v899 = vadd.f32 0.0, %v898
    %v900 = vpop.f32.mrb[0].mxu0
    %v901 = vadd.f32 0.0, %v900
    %902 = vmatprep.mubr.f32.mxu0 0.0
    %903 = vmatmul.mubr.f32.gmra.mrb[0].mxu0 %v672
    %v904 = vpop.f32.mrb[0].mxu0
    %v905 = vadd.f32 0.0, %v904
    %v906 = vpop.f32.mrb[0].mxu0
    %v907 = vadd.f32 0.0, %v906
    %908 = vmatprep.mubr.f32.mxu0 0.0
    %909 = vmatmul.mubr.f32.gmra.mrb[0].mxu0 %v675
    %v910 = vpop.f32.mrb[0].mxu0
    %v911 = vadd.f32 0.0, %v910
    %v912 = vpop.f32.mrb[0].mxu0
    %v913 = vadd.f32 0.0, %v912
    %914 = vmatprep.mubr.f32.mxu0 0.0
    %915 = vmatmul.mubr.f32.gmra.mrb[0].mxu0 %v678
    %v916 = vpop.f32.mrb[0].mxu0
    %v917 = vpop.f32.mrb[0].mxu0
    %918 = vmatprep.mubr.f32.mxu0 0.0
    %919 = vmatmul.mubr.f32.gmra.mrb[0].mxu0 %v681
    %v920 = vpop.f32.mrb[0].mxu0
    %v921 = vpop.f32.mrb[0].mxu0
    %922 = vmatprep.mubr.f32.mxu0 0.0
    %923 = vmatmul.mubr.f32.gmra.mrb[0].mxu0 %v684
    %v924 = vpop.f32.mrb[0].mxu0
    %v925 = vadd.f32 0.0, %v924
    %v926 = vpop.f32.mrb[0].mxu0
    %v927 = vadd.f32 0.0, %v926
    %928 = vmatprep.mubr.f32.mxu0 0.0
    %929 = vmatmul.mubr.f32.gmra.mrb[0].mxu0 %v687
    %v930 = vpop.f32.mrb[0].mxu0
    %v931 = vadd.f32 0.0, %v930
    %v932 = vpop.f32.mrb[0].mxu0
    %v933 = vadd.f32 0.0, %v932
    %934 = vmatprep.mubr.f32.mxu0 0.0
    %935 = vmatmul.mubr.f32.gmra.mrb[0].mxu0 %v690
    %v936 = vpop.f32.mrb[0].mxu0
    %v937 = vadd.f32 0.0, %v936
    %v938 = vpop.f32.mrb[0].mxu0
    %v939 = vadd.f32 0.0, %v938
    %940 = vmatprep.mubr.f32.mxu0 0.0
    %941 = vmatmul.mubr.f32.gmra.mrb[0].mxu0 %v693
    %v942 = vpop.f32.mrb[0].mxu0
    %v943 = vpop.f32.mrb[0].mxu0
    %944 = vmatprep.mubr.f32.mxu0 0.0
    %945 = vmatmul.mubr.f32.gmra.mrb[0].mxu0 %v696
    %v946 = vpop.f32.mrb[0].mxu0
    %v947 = vpop.f32.mrb[0].mxu0
    %948 = vmatprep.mubr.f32.mxu0 0.0
    %949 = vmatmul.mubr.f32.gmra.mrb[0].mxu0 %v699
    %v950 = vpop.f32.mrb[0].mxu0
    %v951 = vadd.f32 0.0, %v950
    %v952 = vpop.f32.mrb[0].mxu0
    %v953 = vadd.f32 0.0, %v952
    %954 = vmatprep.mubr.f32.mxu0 0.0
    %955 = vmatmul.mubr.f32.gmra.mrb[0].mxu0 %v702
    %v956 = vpop.f32.mrb[0].mxu0
    %v957 = vadd.f32 0.0, %v956
    %v958 = vpop.f32.mrb[0].mxu0
    %v959 = vadd.f32 0.0, %v958
    %960 = vmatprep.mubr.f32.mxu0 0.0
    %961 = vmatmul.mubr.f32.gmra.mrb[0].mxu0 %v705
    %v962 = vpop.f32.mrb[0].mxu0
    %v963 = vadd.f32 0.0, %v962
    %v964 = vpop.f32.mrb[0].mxu0
    %v965 = vadd.f32 0.0, %v964
    %966 = vmatprep.mubr.f32.mxu0 0.0
    %967 = vmatmul.mubr.f32.gmra.mrb[0].mxu0 %v708
    %v968 = vpop.f32.mrb[0].mxu0
    %v969 = vpop.f32.mrb[0].mxu0
    %970 = vmatprep.mubr.f32.mxu0 0.0
    %971 = vmatmul.mubr.f32.gmra.mrb[0].mxu0 %v711
    %v972 = vpop.f32.mrb[0].mxu0
    %v973 = vpop.f32.mrb[0].mxu0
    %974 = vmatprep.mubr.f32.mxu0 0.0
    %975 = vmatmul.mubr.f32.gmra.mrb[0].mxu0 %v714
    %v976 = vpop.f32.mrb[0].mxu0
    %v977 = vadd.f32 0.0, %v976
    %v978 = vpop.f32.mrb[0].mxu0
    %v979 = vadd.f32 0.0, %v978
    %980 = vmatprep.mubr.f32.mxu0 0.0
    %981 = vmatmul.mubr.f32.gmra.mrb[0].mxu0 %v717
    %v982 = vpop.f32.mrb[0].mxu0
    %v983 = vadd.f32 0.0, %v982
    %v984 = vpop.f32.mrb[0].mxu0
    %v985 = vadd.f32 0.0, %v984
    %986 = vmatprep.mubr.f32.mxu0 0.0
    %987 = vmatmul.mubr.f32.gmra.mrb[0].mxu0 %v720
    %v988 = vpop.f32.mrb[0].mxu0
    %v989 = vadd.f32 0.0, %v988
    %v990 = vpop.f32.mrb[0].mxu0
    %v991 = vadd.f32 0.0, %v990
    %992 = vmatprep.mubr.f32.mxu0 0.0
    %993 = vmatmul.mubr.f32.gmra.mrb[0].mxu0 %v723
    %v994 = vpop.f32.mrb[0].mxu0
    %v995 = vpop.f32.mrb[0].mxu0
    %996 = vmatprep.mubr.f32.mxu0 0.0
    %997 = vmatmul.mubr.f32.gmra.mrb[0].mxu0 %v726
    %v998 = vpop.f32.mrb[0].mxu0
    %v999 = vpop.f32.mrb[0].mxu0
    %1000 = vdwg.mxu0
    %1001 = vmatprep.subr.mxu0 %v590
    %1002 = vmatpush1.msra.mxu0 %v589
    %1003 = vmatprep.subr.mxu0 %v595
    %1004 = vmatpush1.msra.mxu0 %v594
    %1005 = vmatprep.subr.mxu0 %v600
    %1006 = vmatpush1.msra.mxu0 %v599
    %1007 = vmatprep.subr.mxu0 %v605
    %1008 = vmatpush1.msra.mxu0 %v604
    %1009 = vmatprep.subr.mxu0 0.0
    %1010 = vmatpush1.msra.mxu0 0.0
    %1011 = vmatprep.subr.mxu0 0.0
    %1012 = vmatpush1.msra.mxu0 0.0
    %1013 = vmatprep.subr.mxu0 0.0
    %1014 = vmatpush1.msra.mxu0 0.0
    %1015 = vmatprep.subr.mxu0 0.0
    %1016 = vmatpush1.msra.mxu0 0.0
    %1017 = vmatprep.subr.mxu0 0.0
    %1018 = vmatpush1.msra.mxu0 0.0
    %1019 = vmatprep.subr.mxu0 0.0
    %1020 = vmatpush1.msra.mxu0 0.0
    %1021 = vmatprep.subr.mxu0 0.0
    %1022 = vmatpush1.msra.mxu0 0.0
    %1023 = vmatprep.subr.mxu0 0.0
    %1024 = vmatpush1.msra.mxu0 0.0
    %1025 = vmatprep.subr.mxu0 0.0
    %1026 = vmatpush1.msra.mxu0 0.0
    %1027 = vmatprep.subr.mxu0 0.0
    %1028 = vmatpush1.msra.mxu0 0.0
    %1029 = vmatprep.subr.mxu0 0.0
    %1030 = vmatpush1.msra.mxu0 0.0
    %1031 = vmatprep.subr.mxu0 0.0
    %1032 = vmatpush1.msra.mxu0 0.0
    %1033 = vmatprep.subr.mxu0 0.0
    %1034 = vmatpush1.msra.mxu0 0.0
    %1035 = vmatprep.subr.mxu0 0.0
    %1036 = vmatpush1.msra.mxu0 0.0
    %1037 = vmatprep.subr.mxu0 0.0
    %1038 = vmatpush1.msra.mxu0 0.0
    %1039 = vmatprep.subr.mxu0 0.0
    %1040 = vmatpush1.msra.mxu0 0.0
    %1041 = vmatprep.subr.mxu0 0.0
    %1042 = vmatpush1.msra.mxu0 0.0
    %1043 = vmatprep.subr.mxu0 0.0
    %1044 = vmatpush1.msra.mxu0 0.0
    %1045 = vmatprep.subr.mxu0 0.0
    %1046 = vmatpush1.msra.mxu0 0.0
    %1047 = vmatprep.subr.mxu0 0.0
    %1048 = vmatpush1.msra.mxu0 0.0
    %1049 = vmatprep.subr.mxu0 0.0
    %1050 = vmatpush1.msra.mxu0 0.0
    %1051 = vmatprep.subr.mxu0 0.0
    %1052 = vmatpush1.msra.mxu0 0.0
    %1053 = vmatprep.subr.mxu0 0.0
    %1054 = vmatpush1.msra.mxu0 0.0
    %1055 = vmatprep.subr.mxu0 0.0
    %1056 = vmatpush1.msra.mxu0 0.0
    %1057 = vmatprep.subr.mxu0 0.0
    %1058 = vmatpush1.msra.mxu0 0.0
    %1059 = vmatprep.subr.mxu0 0.0
    %1060 = vmatpush1.msra.mxu0 0.0
    %1061 = vmatprep.subr.mxu0 0.0
    %1062 = vmatpush1.msra.mxu0 0.0
    %1063 = vmatprep.subr.mxu0 0.0
    %1064 = vmatpush1.msra.mxu0 0.0
    %1065 = vmatprep.mubr.f32.mxu0 0.0
    %1066 = vmatmul.mubr.f32.gmra.mrb[0].mxu0 %v609
    %v1067 = vpop.f32.mrb[0].mxu0
    %v1068 = vadd.f32 0.0, %v1067
    %v1069 = vpop.f32.mrb[0].mxu0
    %v1070 = vadd.f32 0.0, %v1069
    %1071 = vmatprep.mubr.f32.mxu0 0.0
    %1072 = vmatmul.mubr.f32.gmra.mrb[0].mxu0 %v612
    %v1073 = vpop.f32.mrb[0].mxu0
    %v1074 = vadd.f32 0.0, %v1073
    %v1075 = vpop.f32.mrb[0].mxu0
    %v1076 = vadd.f32 0.0, %v1075
    %1077 = vmatprep.mubr.f32.mxu0 0.0
    %1078 = vmatmul.mubr.f32.gmra.mrb[0].mxu0 %v615
    %v1079 = vpop.f32.mrb[0].mxu0
    %v1080 = vadd.f32 0.0, %v1079
    %v1081 = vpop.f32.mrb[0].mxu0
    %v1082 = vadd.f32 0.0, %v1081
    %1083 = vmatprep.mubr.f32.mxu0 0.0
    %1084 = vmatmul.mubr.f32.gmra.mrb[0].mxu0 %v618
    %v1085 = vpop.f32.mrb[0].mxu0
    %v1086 = vadd.f32 0.0, %v1085
    %v1087 = vpop.f32.mrb[0].mxu0
    %v1088 = vadd.f32 0.0, %v1087
    %1089 = vmatprep.mubr.f32.mxu0 0.0
    %1090 = vmatmul.mubr.f32.gmra.mrb[0].mxu0 %v621
    %v1091 = vpop.f32.mrb[0].mxu0
    %v1092 = vadd.f32 0.0, %v1091
    %v1093 = vpop.f32.mrb[0].mxu0
    %v1094 = vadd.f32 0.0, %v1093
    %1095 = vmatprep.mubr.f32.mxu0 0.0
    %1096 = vmatmul.mubr.f32.gmra.mrb[0].mxu0 %v624
    %v1097 = vpop.f32.mrb[0].mxu0
    %v1098 = vadd.f32 0.0, %v1097
    %v1099 = vpop.f32.mrb[0].mxu0
    %v1100 = vadd.f32 0.0, %v1099
    %1101 = vmatprep.mubr.f32.mxu0 0.0
    %1102 = vmatmul.mubr.f32.gmra.mrb[0].mxu0 %v627
    %v1103 = vpop.f32.mrb[0].mxu0
    %v1104 = vadd.f32 0.0, %v1103
    %v1105 = vpop.f32.mrb[0].mxu0
    %v1106 = vadd.f32 0.0, %v1105
    %1107 = vmatprep.mubr.f32.mxu0 0.0
    %1108 = vmatmul.mubr.f32.gmra.mrb[0].mxu0 %v630
    %v1109 = vpop.f32.mrb[0].mxu0
    %v1110 = vadd.f32 0.0, %v1109
    %v1111 = vpop.f32.mrb[0].mxu0
    %v1112 = vadd.f32 0.0, %v1111
    %1113 = vmatprep.mubr.f32.mxu0 0.0
    %1114 = vmatmul.mubr.f32.gmra.mrb[0].mxu0 %v633
    %v1115 = vpop.f32.mrb[0].mxu0
    %v1116 = vadd.f32 0.0, %v1115
    %v1117 = vpop.f32.mrb[0].mxu0
    %v1118 = vadd.f32 0.0, %v1117
    %1119 = vmatprep.mubr.f32.mxu0 0.0
    %1120 = vmatmul.mubr.f32.gmra.mrb[0].mxu0 %v636
    %v1121 = vpop.f32.mrb[0].mxu0
    %v1122 = vadd.f32 0.0, %v1121
    %v1123 = vpop.f32.mrb[0].mxu0
    %v1124 = vadd.f32 0.0, %v1123
    %1125 = vmatprep.mubr.f32.mxu0 0.0
    %1126 = vmatmul.mubr.f32.gmra.mrb[0].mxu0 %v639
    %v1127 = vpop.f32.mrb[0].mxu0
    %v1128 = vadd.f32 0.0, %v1127
    %v1129 = vpop.f32.mrb[0].mxu0
    %v1130 = vadd.f32 0.0, %v1129
    %1131 = vmatprep.mubr.f32.mxu0 0.0
    %1132 = vmatmul.mubr.f32.gmra.mrb[0].mxu0 %v642
    %v1133 = vpop.f32.mrb[0].mxu0
    %v1134 = vadd.f32 0.0, %v1133
    %v1135 = vpop.f32.mrb[0].mxu0
    %v1136 = vadd.f32 0.0, %v1135
    %1137 = vmatprep.mubr.f32.mxu0 0.0
    %1138 = vmatmul.mubr.f32.gmra.mrb[0].mxu0 %v645
    %v1139 = vpop.f32.mrb[0].mxu0
    %v1140 = vadd.f32 0.0, %v1139
    %v1141 = vpop.f32.mrb[0].mxu0
    %v1142 = vadd.f32 0.0, %v1141
    %1143 = vmatprep.mubr.f32.mxu0 0.0
    %1144 = vmatmul.mubr.f32.gmra.mrb[0].mxu0 %v648
    %v1145 = vpop.f32.mrb[0].mxu0
    %v1146 = vadd.f32 0.0, %v1145
    %v1147 = vpop.f32.mrb[0].mxu0
    %v1148 = vadd.f32 0.0, %v1147
    %1149 = vmatprep.mubr.f32.mxu0 0.0
    %1150 = vmatmul.mubr.f32.gmra.mrb[0].mxu0 %v651
    %v1151 = vpop.f32.mrb[0].mxu0
    %v1152 = vadd.f32 0.0, %v1151
    %v1153 = vpop.f32.mrb[0].mxu0
    %v1154 = vadd.f32 0.0, %v1153
    %1155 = vmatprep.mubr.f32.mxu0 0.0
    %1156 = vmatmul.mubr.f32.gmra.mrb[0].mxu0 %v654
    %v1157 = vpop.f32.mrb[0].mxu0
    %v1158 = vadd.f32 0.0, %v1157
    %v1159 = vpop.f32.mrb[0].mxu0
    %v1160 = vadd.f32 0.0, %v1159
    %1161 = vmatprep.mubr.f32.mxu0 0.0
    %1162 = vmatmul.mubr.f32.gmra.mrb[0].mxu0 %v657
    %v1163 = vpop.f32.mrb[0].mxu0
    %v1164 = vadd.f32 0.0, %v1163
    %v1165 = vpop.f32.mrb[0].mxu0
    %v1166 = vadd.f32 0.0, %v1165
    %1167 = vmatprep.mubr.f32.mxu0 0.0
    %1168 = vmatmul.mubr.f32.gmra.mrb[0].mxu0 %v660
    %v1169 = vpop.f32.mrb[0].mxu0
    %v1170 = vadd.f32 0.0, %v1169
    %v1171 = vpop.f32.mrb[0].mxu0
    %v1172 = vadd.f32 0.0, %v1171
    %1173 = vmatprep.mubr.f32.mxu0 0.0
    %1174 = vmatmul.mubr.f32.gmra.mrb[0].mxu0 %v663
    %v1175 = vpop.f32.mrb[0].mxu0
    %v1176 = vadd.f32 0.0, %v1175
    %v1177 = vpop.f32.mrb[0].mxu0
    %v1178 = vadd.f32 0.0, %v1177
    %1179 = vmatprep.mubr.f32.mxu0 0.0
    %1180 = vmatmul.mubr.f32.gmra.mrb[0].mxu0 %v666
    %v1181 = vpop.f32.mrb[0].mxu0
    %v1182 = vadd.f32 0.0, %v1181
    %v1183 = vpop.f32.mrb[0].mxu0
    %v1184 = vadd.f32 0.0, %v1183
    %1185 = vmatprep.mubr.f32.mxu0 0.0
    %1186 = vmatmul.mubr.f32.gmra.mrb[0].mxu0 %v669
    %v1187 = vpop.f32.mrb[0].mxu0
    %v1188 = vadd.f32 0.0, %v1187
    %v1189 = vpop.f32.mrb[0].mxu0
    %v1190 = vadd.f32 0.0, %v1189
    %1191 = vmatprep.mubr.f32.mxu0 0.0
    %1192 = vmatmul.mubr.f32.gmra.mrb[0].mxu0 %v672
    %v1193 = vpop.f32.mrb[0].mxu0
    %v1194 = vadd.f32 0.0, %v1193
    %v1195 = vpop.f32.mrb[0].mxu0
    %v1196 = vadd.f32 0.0, %v1195
    %1197 = vmatprep.mubr.f32.mxu0 0.0
    %1198 = vmatmul.mubr.f32.gmra.mrb[0].mxu0 %v675
    %v1199 = vpop.f32.mrb[0].mxu0
    %v1200 = vadd.f32 0.0, %v1199
    %v1201 = vpop.f32.mrb[0].mxu0
    %v1202 = vadd.f32 0.0, %v1201
    %1203 = vmatprep.mubr.f32.mxu0 0.0
    %1204 = vmatmul.mubr.f32.gmra.mrb[0].mxu0 %v678
    %v1205 = vpop.f32.mrb[0].mxu0
    %v1206 = vadd.f32 0.0, %v1205
    %v1207 = vpop.f32.mrb[0].mxu0
    %v1208 = vadd.f32 0.0, %v1207
    %1209 = vmatprep.mubr.f32.mxu0 0.0
    %1210 = vmatmul.mubr.f32.gmra.mrb[0].mxu0 %v681
    %v1211 = vpop.f32.mrb[0].mxu0
    %v1212 = vadd.f32 0.0, %v1211
    %v1213 = vpop.f32.mrb[0].mxu0
    %v1214 = vadd.f32 0.0, %v1213
    %1215 = vmatprep.mubr.f32.mxu0 0.0
    %1216 = vmatmul.mubr.f32.gmra.mrb[0].mxu0 %v684
    %v1217 = vpop.f32.mrb[0].mxu0
    %v1218 = vadd.f32 0.0, %v1217
    %v1219 = vpop.f32.mrb[0].mxu0
    %v1220 = vadd.f32 0.0, %v1219
    %1221 = vmatprep.mubr.f32.mxu0 0.0
    %1222 = vmatmul.mubr.f32.gmra.mrb[0].mxu0 %v687
    %v1223 = vpop.f32.mrb[0].mxu0
    %v1224 = vadd.f32 0.0, %v1223
    %v1225 = vpop.f32.mrb[0].mxu0
    %v1226 = vadd.f32 0.0, %v1225
    %1227 = vmatprep.mubr.f32.mxu0 0.0
    %1228 = vmatmul.mubr.f32.gmra.mrb[0].mxu0 %v690
    %v1229 = vpop.f32.mrb[0].mxu0
    %v1230 = vadd.f32 0.0, %v1229
    %v1231 = vpop.f32.mrb[0].mxu0
    %v1232 = vadd.f32 0.0, %v1231
    %1233 = vmatprep.mubr.f32.mxu0 0.0
    %1234 = vmatmul.mubr.f32.gmra.mrb[0].mxu0 %v693
    %v1235 = vpop.f32.mrb[0].mxu0
    %v1236 = vadd.f32 0.0, %v1235
    %v1237 = vpop.f32.mrb[0].mxu0
    %v1238 = vadd.f32 0.0, %v1237
    %1239 = vmatprep.mubr.f32.mxu0 0.0
    %1240 = vmatmul.mubr.f32.gmra.mrb[0].mxu0 %v696
    %v1241 = vpop.f32.mrb[0].mxu0
    %v1242 = vadd.f32 0.0, %v1241
    %v1243 = vpop.f32.mrb[0].mxu0
    %v1244 = vadd.f32 0.0, %v1243
    %1245 = vmatprep.mubr.f32.mxu0 0.0
    %1246 = vmatmul.mubr.f32.gmra.mrb[0].mxu0 %v699
    %v1247 = vpop.f32.mrb[0].mxu0
    %v1248 = vadd.f32 0.0, %v1247
    %v1249 = vpop.f32.mrb[0].mxu0
    %v1250 = vadd.f32 0.0, %v1249
    %1251 = vmatprep.mubr.f32.mxu0 0.0
    %1252 = vmatmul.mubr.f32.gmra.mrb[0].mxu0 %v702
    %v1253 = vpop.f32.mrb[0].mxu0
    %v1254 = vadd.f32 0.0, %v1253
    %v1255 = vpop.f32.mrb[0].mxu0
    %v1256 = vadd.f32 0.0, %v1255
    %1257 = vmatprep.mubr.f32.mxu0 0.0
    %1258 = vmatmul.mubr.f32.gmra.mrb[0].mxu0 %v705
    %v1259 = vpop.f32.mrb[0].mxu0
    %v1260 = vadd.f32 0.0, %v1259
    %v1261 = vpop.f32.mrb[0].mxu0
    %v1262 = vadd.f32 0.0, %v1261
    %1263 = vmatprep.mubr.f32.mxu0 0.0
    %1264 = vmatmul.mubr.f32.gmra.mrb[0].mxu0 %v708
    %v1265 = vpop.f32.mrb[0].mxu0
    %v1266 = vadd.f32 0.0, %v1265
    %v1267 = vpop.f32.mrb[0].mxu0
    %v1268 = vadd.f32 0.0, %v1267
    %1269 = vmatprep.mubr.f32.mxu0 0.0
    %1270 = vmatmul.mubr.f32.gmra.mrb[0].mxu0 %v711
    %v1271 = vpop.f32.mrb[0].mxu0
    %v1272 = vadd.f32 0.0, %v1271
    %v1273 = vpop.f32.mrb[0].mxu0
    %v1274 = vadd.f32 0.0, %v1273
    %1275 = vmatprep.mubr.f32.mxu0 0.0
    %1276 = vmatmul.mubr.f32.gmra.mrb[0].mxu0 %v714
    %v1277 = vpop.f32.mrb[0].mxu0
    %v1278 = vadd.f32 0.0, %v1277
    %v1279 = vpop.f32.mrb[0].mxu0
    %v1280 = vadd.f32 0.0, %v1279
    %1281 = vmatprep.mubr.f32.mxu0 0.0
    %1282 = vmatmul.mubr.f32.gmra.mrb[0].mxu0 %v717
    %v1283 = vpop.f32.mrb[0].mxu0
    %v1284 = vadd.f32 0.0, %v1283
    %v1285 = vpop.f32.mrb[0].mxu0
    %v1286 = vadd.f32 0.0, %v1285
    %1287 = vmatprep.mubr.f32.mxu0 0.0
    %1288 = vmatmul.mubr.f32.gmra.mrb[0].mxu0 %v720
    %v1289 = vpop.f32.mrb[0].mxu0
    %v1290 = vadd.f32 0.0, %v1289
    %v1291 = vpop.f32.mrb[0].mxu0
    %v1292 = vadd.f32 0.0, %v1291
    %1293 = vmatprep.mubr.f32.mxu0 0.0
    %1294 = vmatmul.mubr.f32.gmra.mrb[0].mxu0 %v723
    %v1295 = vpop.f32.mrb[0].mxu0
    %v1296 = vadd.f32 0.0, %v1295
    %v1297 = vpop.f32.mrb[0].mxu0
    %v1298 = vadd.f32 0.0, %v1297
    %1299 = vmatprep.mubr.f32.mxu0 0.0
    %1300 = vmatmul.mubr.f32.gmra.mrb[0].mxu0 %v726
    %v1301 = vpop.f32.mrb[0].mxu0
    %v1302 = vadd.f32 0.0, %v1301
    %v1303 = vpop.f32.mrb[0].mxu0
    %v1304 = vadd.f32 0.0, %v1303
    %1305 = vdwg.mxu0
    %1306 = vmatprep.subr.mxu0 0.0
    %1307 = vmatpush1.msra.mxu0 %v591
    %1308 = vmatprep.subr.mxu0 0.0
    %1309 = vmatpush1.msra.mxu0 %v596
    %1310 = vmatprep.subr.mxu0 0.0
    %1311 = vmatpush1.msra.mxu0 %v601
    %1312 = vmatprep.subr.mxu0 0.0
    %1313 = vmatpush1.msra.mxu0 %v606
    %1314 = vmatprep.subr.mxu0 0.0
    %1315 = vmatpush1.msra.mxu0 0.0
    %1316 = vmatprep.subr.mxu0 0.0
    %1317 = vmatpush1.msra.mxu0 0.0
    %1318 = vmatprep.subr.mxu0 0.0
    %1319 = vmatpush1.msra.mxu0 0.0
    %1320 = vmatprep.subr.mxu0 0.0
    %1321 = vmatpush1.msra.mxu0 0.0
    %1322 = vmatprep.subr.mxu0 0.0
    %1323 = vmatpush1.msra.mxu0 0.0
    %1324 = vmatprep.subr.mxu0 0.0
    %1325 = vmatpush1.msra.mxu0 0.0
    %1326 = vmatprep.subr.mxu0 0.0
    %1327 = vmatpush1.msra.mxu0 0.0
    %1328 = vmatprep.subr.mxu0 0.0
    %1329 = vmatpush1.msra.mxu0 0.0
    %1330 = vmatprep.subr.mxu0 0.0
    %1331 = vmatpush1.msra.mxu0 0.0
    %1332 = vmatprep.subr.mxu0 0.0
    %1333 = vmatpush1.msra.mxu0 0.0
    %1334 = vmatprep.subr.mxu0 0.0
    %1335 = vmatpush1.msra.mxu0 0.0
    %1336 = vmatprep.subr.mxu0 0.0
    %1337 = vmatpush1.msra.mxu0 0.0
    %1338 = vmatprep.subr.mxu0 0.0
    %1339 = vmatpush1.msra.mxu0 0.0
    %1340 = vmatprep.subr.mxu0 0.0
    %1341 = vmatpush1.msra.mxu0 0.0
    %1342 = vmatprep.subr.mxu0 0.0
    %1343 = vmatpush1.msra.mxu0 0.0
    %1344 = vmatprep.subr.mxu0 0.0
    %1345 = vmatpush1.msra.mxu0 0.0
    %1346 = vmatprep.subr.mxu0 0.0
    %1347 = vmatpush1.msra.mxu0 0.0
    %1348 = vmatprep.subr.mxu0 0.0
    %1349 = vmatpush1.msra.mxu0 0.0
    %1350 = vmatprep.subr.mxu0 0.0
    %1351 = vmatpush1.msra.mxu0 0.0
    %1352 = vmatprep.subr.mxu0 0.0
    %1353 = vmatpush1.msra.mxu0 0.0
    %1354 = vmatprep.subr.mxu0 0.0
    %1355 = vmatpush1.msra.mxu0 0.0
    %1356 = vmatprep.subr.mxu0 0.0
    %1357 = vmatpush1.msra.mxu0 0.0
    %1358 = vmatprep.subr.mxu0 0.0
    %1359 = vmatpush1.msra.mxu0 0.0
    %1360 = vmatprep.subr.mxu0 0.0
    %1361 = vmatpush1.msra.mxu0 0.0
    %1362 = vmatprep.subr.mxu0 0.0
    %1363 = vmatpush1.msra.mxu0 0.0
    %1364 = vmatprep.subr.mxu0 0.0
    %1365 = vmatpush1.msra.mxu0 0.0
    %1366 = vmatprep.subr.mxu0 0.0
    %1367 = vmatpush1.msra.mxu0 0.0
    %1368 = vmatprep.subr.mxu0 0.0
    %1369 = vmatpush1.msra.mxu0 0.0
    %1370 = vmatprep.mubr.f32.mxu0 0.0
    %1371 = vmatmul.mubr.f32.gmra.mrb[0].mxu0 %v609
    %v1372 = vpop.f32.mrb[0].mxu0
    %v1373 = vpop.f32.mrb[0].mxu0
    %1374 = vmatprep.mubr.f32.mxu0 0.0
    %1375 = vmatmul.mubr.f32.gmra.mrb[0].mxu0 %v612
    %v1376 = vpop.f32.mrb[0].mxu0
    %v1377 = vadd.f32 0.0, %v1376
    %v1378 = vpop.f32.mrb[0].mxu0
    %1379 = vmatprep.mubr.f32.mxu0 0.0
    %1380 = vmatmul.mubr.f32.gmra.mrb[0].mxu0 %v615
    %v1381 = vpop.f32.mrb[0].mxu0
    %v1382 = vadd.f32 0.0, %v1381
    %v1383 = vpop.f32.mrb[0].mxu0
    %1384 = vmatprep.mubr.f32.mxu0 0.0
    %1385 = vmatmul.mubr.f32.gmra.mrb[0].mxu0 %v618
    %v1386 = vpop.f32.mrb[0].mxu0
    %v1387 = vpop.f32.mrb[0].mxu0
    %1388 = vmatprep.mubr.f32.mxu0 0.0
    %1389 = vmatmul.mubr.f32.gmra.mrb[0].mxu0 %v621
    %v1390 = vpop.f32.mrb[0].mxu0
    %v1391 = vadd.f32 0.0, %v1390
    %v1392 = vpop.f32.mrb[0].mxu0
    %1393 = vmatprep.mubr.f32.mxu0 0.0
    %1394 = vmatmul.mubr.f32.gmra.mrb[0].mxu0 %v624
    %v1395 = vpop.f32.mrb[0].mxu0
    %v1396 = vpop.f32.mrb[0].mxu0
    %1397 = vmatprep.mubr.f32.mxu0 0.0
    %1398 = vmatmul.mubr.f32.gmra.mrb[0].mxu0 %v627
    %v1399 = vpop.f32.mrb[0].mxu0
    %v1400 = vadd.f32 0.0, %v1399
    %v1401 = vpop.f32.mrb[0].mxu0
    %1402 = vmatprep.mubr.f32.mxu0 0.0
    %1403 = vmatmul.mubr.f32.gmra.mrb[0].mxu0 %v630
    %v1404 = vpop.f32.mrb[0].mxu0
    %v1405 = vadd.f32 0.0, %v1404
    %v1406 = vpop.f32.mrb[0].mxu0
    %1407 = vmatprep.mubr.f32.mxu0 0.0
    %1408 = vmatmul.mubr.f32.gmra.mrb[0].mxu0 %v633
    %v1409 = vpop.f32.mrb[0].mxu0
    %v1410 = vpop.f32.mrb[0].mxu0
    %1411 = vmatprep.mubr.f32.mxu0 0.0
    %1412 = vmatmul.mubr.f32.gmra.mrb[0].mxu0 %v636
    %v1413 = vpop.f32.mrb[0].mxu0
    %v1414 = vadd.f32 0.0, %v1413
    %v1415 = vpop.f32.mrb[0].mxu0
    %1416 = vmatprep.mubr.f32.mxu0 0.0
    %1417 = vmatmul.mubr.f32.gmra.mrb[0].mxu0 %v639
    %v1418 = vpop.f32.mrb[0].mxu0
    %v1419 = vpop.f32.mrb[0].mxu0
    %1420 = vmatprep.mubr.f32.mxu0 0.0
    %1421 = vmatmul.mubr.f32.gmra.mrb[0].mxu0 %v642
    %v1422 = vpop.f32.mrb[0].mxu0
    %v1423 = vadd.f32 0.0, %v1422
    %v1424 = vpop.f32.mrb[0].mxu0
    %1425 = vmatprep.mubr.f32.mxu0 0.0
    %1426 = vmatmul.mubr.f32.gmra.mrb[0].mxu0 %v645
    %v1427 = vpop.f32.mrb[0].mxu0
    %v1428 = vadd.f32 0.0, %v1427
    %v1429 = vpop.f32.mrb[0].mxu0
    %1430 = vmatprep.mubr.f32.mxu0 0.0
    %1431 = vmatmul.mubr.f32.gmra.mrb[0].mxu0 %v648
    %v1432 = vpop.f32.mrb[0].mxu0
    %v1433 = vpop.f32.mrb[0].mxu0
    %1434 = vmatprep.mubr.f32.mxu0 0.0
    %1435 = vmatmul.mubr.f32.gmra.mrb[0].mxu0 %v651
    %v1436 = vpop.f32.mrb[0].mxu0
    %v1437 = vadd.f32 0.0, %v1436
    %v1438 = vpop.f32.mrb[0].mxu0
    %1439 = vmatprep.mubr.f32.mxu0 0.0
    %1440 = vmatmul.mubr.f32.gmra.mrb[0].mxu0 %v654
    %v1441 = vpop.f32.mrb[0].mxu0
    %v1442 = vpop.f32.mrb[0].mxu0
    %1443 = vmatprep.mubr.f32.mxu0 0.0
    %1444 = vmatmul.mubr.f32.gmra.mrb[0].mxu0 %v657
    %v1445 = vpop.f32.mrb[0].mxu0
    %v1446 = vadd.f32 0.0, %v1445
    %v1447 = vpop.f32.mrb[0].mxu0
    %1448 = vmatprep.mubr.f32.mxu0 0.0
    %1449 = vmatmul.mubr.f32.gmra.mrb[0].mxu0 %v660
    %v1450 = vpop.f32.mrb[0].mxu0
    %v1451 = vadd.f32 0.0, %v1450
    %v1452 = vpop.f32.mrb[0].mxu0
    %1453 = vmatprep.mubr.f32.mxu0 0.0
    %1454 = vmatmul.mubr.f32.gmra.mrb[0].mxu0 %v663
    %v1455 = vpop.f32.mrb[0].mxu0
    %v1456 = vpop.f32.mrb[0].mxu0
    %1457 = vmatprep.mubr.f32.mxu0 0.0
    %1458 = vmatmul.mubr.f32.gmra.mrb[0].mxu0 %v666
    %v1459 = vpop.f32.mrb[0].mxu0
    %v1460 = vadd.f32 0.0, %v1459
    %v1461 = vpop.f32.mrb[0].mxu0
    %1462 = vmatprep.mubr.f32.mxu0 0.0
    %1463 = vmatmul.mubr.f32.gmra.mrb[0].mxu0 %v669
    %v1464 = vpop.f32.mrb[0].mxu0
    %v1465 = vpop.f32.mrb[0].mxu0
    %1466 = vmatprep.mubr.f32.mxu0 0.0
    %1467 = vmatmul.mubr.f32.gmra.mrb[0].mxu0 %v672
    %v1468 = vpop.f32.mrb[0].mxu0
    %v1469 = vadd.f32 0.0, %v1468
    %v1470 = vpop.f32.mrb[0].mxu0
    %1471 = vmatprep.mubr.f32.mxu0 0.0
    %1472 = vmatmul.mubr.f32.gmra.mrb[0].mxu0 %v675
    %v1473 = vpop.f32.mrb[0].mxu0
    %v1474 = vadd.f32 0.0, %v1473
    %v1475 = vpop.f32.mrb[0].mxu0
    %1476 = vmatprep.mubr.f32.mxu0 0.0
    %1477 = vmatmul.mubr.f32.gmra.mrb[0].mxu0 %v678
    %v1478 = vpop.f32.mrb[0].mxu0
    %v1479 = vpop.f32.mrb[0].mxu0
    %1480 = vmatprep.mubr.f32.mxu0 0.0
    %1481 = vmatmul.mubr.f32.gmra.mrb[0].mxu0 %v681
    %v1482 = vpop.f32.mrb[0].mxu0
    %v1483 = vadd.f32 0.0, %v1482
    %v1484 = vpop.f32.mrb[0].mxu0
    %1485 = vmatprep.mubr.f32.mxu0 0.0
    %1486 = vmatmul.mubr.f32.gmra.mrb[0].mxu0 %v684
    %v1487 = vpop.f32.mrb[0].mxu0
    %v1488 = vpop.f32.mrb[0].mxu0
    %1489 = vmatprep.mubr.f32.mxu0 0.0
    %1490 = vmatmul.mubr.f32.gmra.mrb[0].mxu0 %v687
    %v1491 = vpop.f32.mrb[0].mxu0
    %v1492 = vadd.f32 0.0, %v1491
    %v1493 = vpop.f32.mrb[0].mxu0
    %1494 = vmatprep.mubr.f32.mxu0 0.0
    %1495 = vmatmul.mubr.f32.gmra.mrb[0].mxu0 %v690
    %v1496 = vpop.f32.mrb[0].mxu0
    %v1497 = vadd.f32 0.0, %v1496
    %v1498 = vpop.f32.mrb[0].mxu0
    %1499 = vmatprep.mubr.f32.mxu0 0.0
    %1500 = vmatmul.mubr.f32.gmra.mrb[0].mxu0 %v693
    %v1501 = vpop.f32.mrb[0].mxu0
    %v1502 = vpop.f32.mrb[0].mxu0
    %1503 = vmatprep.mubr.f32.mxu0 0.0
    %1504 = vmatmul.mubr.f32.gmra.mrb[0].mxu0 %v696
    %v1505 = vpop.f32.mrb[0].mxu0
    %v1506 = vadd.f32 0.0, %v1505
    %v1507 = vpop.f32.mrb[0].mxu0
    %1508 = vmatprep.mubr.f32.mxu0 0.0
    %1509 = vmatmul.mubr.f32.gmra.mrb[0].mxu0 %v699
    %v1510 = vpop.f32.mrb[0].mxu0
    %v1511 = vpop.f32.mrb[0].mxu0
    %1512 = vmatprep.mubr.f32.mxu0 0.0
    %1513 = vmatmul.mubr.f32.gmra.mrb[0].mxu0 %v702
    %v1514 = vpop.f32.mrb[0].mxu0
    %v1515 = vadd.f32 0.0, %v1514
    %v1516 = vpop.f32.mrb[0].mxu0
    %1517 = vmatprep.mubr.f32.mxu0 0.0
    %1518 = vmatmul.mubr.f32.gmra.mrb[0].mxu0 %v705
    %v1519 = vpop.f32.mrb[0].mxu0
    %v1520 = vadd.f32 0.0, %v1519
    %v1521 = vpop.f32.mrb[0].mxu0
    %1522 = vmatprep.mubr.f32.mxu0 0.0
    %1523 = vmatmul.mubr.f32.gmra.mrb[0].mxu0 %v708
    %v1524 = vpop.f32.mrb[0].mxu0
    %v1525 = vpop.f32.mrb[0].mxu0
    %1526 = vmatprep.mubr.f32.mxu0 0.0
    %1527 = vmatmul.mubr.f32.gmra.mrb[0].mxu0 %v711
    %v1528 = vpop.f32.mrb[0].mxu0
    %v1529 = vadd.f32 0.0, %v1528
    %v1530 = vpop.f32.mrb[0].mxu0
    %1531 = vmatprep.mubr.f32.mxu0 0.0
    %1532 = vmatmul.mubr.f32.gmra.mrb[0].mxu0 %v714
    %v1533 = vpop.f32.mrb[0].mxu0
    %v1534 = vpop.f32.mrb[0].mxu0
    %1535 = vmatprep.mubr.f32.mxu0 0.0
    %1536 = vmatmul.mubr.f32.gmra.mrb[0].mxu0 %v717
    %v1537 = vpop.f32.mrb[0].mxu0
    %v1538 = vadd.f32 0.0, %v1537
    %v1539 = vpop.f32.mrb[0].mxu0
    %1540 = vmatprep.mubr.f32.mxu0 0.0
    %1541 = vmatmul.mubr.f32.gmra.mrb[0].mxu0 %v720
    %v1542 = vpop.f32.mrb[0].mxu0
    %v1543 = vadd.f32 0.0, %v1542
    %v1544 = vpop.f32.mrb[0].mxu0
    %1545 = vmatprep.mubr.f32.mxu0 0.0
    %1546 = vmatmul.mubr.f32.gmra.mrb[0].mxu0 %v723
    %v1547 = vpop.f32.mrb[0].mxu0
    %v1548 = vpop.f32.mrb[0].mxu0
    %1549 = vmatprep.mubr.f32.mxu0 0.0
    %1550 = vmatmul.mubr.f32.gmra.mrb[0].mxu0 %v726
    %v1551 = vpop.f32.mrb[0].mxu0
    %v1552 = vadd.f32 0.0, %v1551
    %v1553 = vpop.f32.mrb[0].mxu0
    %1554 = vdwg.mxu0
    %v1555 = vld [vmem:[%s3] sm:$0x1]
    %vm1580 = vcmask 1046528
    %v1581 = vrot.slane %v797, 1
    %v1582 = vrot.slane %v803, 1
    %v1583 = vsel %vm1580, %v1581, %v1582
    %v1584 = vrot.slane %v809, 1
    %v1585 = vsel %vm1580, %v1582, %v1584
    %v1586 = vrot.slane %v823, 1
    %v1587 = vrot.slane %v829, 1
    %v1588 = vsel %vm1580, %v1586, %v1587
    %v1589 = vrot.slane %v835, 1
    %v1590 = vsel %vm1580, %v1587, %v1589
    %v1591 = vrot.slane %v849, 1
    %v1592 = vrot.slane %v855, 1
    %v1593 = vsel %vm1580, %v1591, %v1592
    %v1594 = vrot.slane %v861, 1
    %v1595 = vsel %vm1580, %v1592, %v1594
    %v1596 = vrot.slane %v875, 1
    %v1597 = vrot.slane %v881, 1
    %v1598 = vsel %vm1580, %v1596, %v1597
    %v1599 = vrot.slane %v887, 1
    %v1600 = vsel %vm1580, %v1597, %v1599
    %v1601 = vrot.slane %v901, 1
    %v1602 = vrot.slane %v907, 1
    %v1603 = vsel %vm1580, %v1601, %v1602
    %v1604 = vrot.slane %v913, 1
    %v1605 = vsel %vm1580, %v1602, %v1604
    %v1606 = vrot.slane %v927, 1
    %v1607 = vrot.slane %v933, 1
    %v1608 = vsel %vm1580, %v1606, %v1607
    %v1609 = vrot.slane %v939, 1
    %v1610 = vsel %vm1580, %v1607, %v1609
    %v1611 = vrot.slane %v953, 1
    %v1612 = vrot.slane %v959, 1
    %v1613 = vsel %vm1580, %v1611, %v1612
    %v1614 = vrot.slane %v965, 1
    %v1615 = vsel %vm1580, %v1612, %v1614
    %v1616 = vrot.slane %v979, 1
    %v1617 = vrot.slane %v985, 1
    %v1618 = vsel %vm1580, %v1616, %v1617
    %v1619 = vrot.slane %v991, 1
    %v1620 = vsel %vm1580, %v1617, %v1619
    %v1645 = vadd.f32 %v795, %v1583
    %v1646 = vadd.f32 %v801, %v1585
    %v1647 = vadd.f32 %v807, %v1584
    %v1648 = vadd.f32 %v821, %v1588
    %v1649 = vadd.f32 %v827, %v1590
    %v1650 = vadd.f32 %v833, %v1589
    %v1651 = vadd.f32 %v847, %v1593
    %v1652 = vadd.f32 %v853, %v1595
    %v1653 = vadd.f32 %v859, %v1594
    %v1654 = vadd.f32 %v873, %v1598
    %v1655 = vadd.f32 %v879, %v1600
    %v1656 = vadd.f32 %v885, %v1599
    %v1657 = vadd.f32 %v899, %v1603
    %v1658 = vadd.f32 %v905, %v1605
    %v1659 = vadd.f32 %v911, %v1604
    %v1660 = vadd.f32 %v925, %v1608
    %v1661 = vadd.f32 %v931, %v1610
    %v1662 = vadd.f32 %v937, %v1609
    %v1663 = vadd.f32 %v951, %v1613
    %v1664 = vadd.f32 %v957, %v1615
    %v1665 = vadd.f32 %v963, %v1614
    %v1666 = vadd.f32 %v977, %v1618
    %v1667 = vadd.f32 %v983, %v1620
    %v1668 = vadd.f32 %v989, %v1619
    %vm1693 = vcmask 1045504
    %v1694 = vrot.slane %v1068, 2
    %v1695 = vrot.slane %v1074, 2
    %v1696 = vsel %vm1693, %v1694, %v1695
    %v1697 = vrot.slane %v1080, 2
    %v1698 = vsel %vm1693, %v1695, %v1697
    %v1699 = vrot.slane %v1098, 2
    %v1700 = vrot.slane %v1104, 2
    %v1701 = vsel %vm1693, %v1699, %v1700
    %v1702 = vrot.slane %v1110, 2
    %v1703 = vsel %vm1693, %v1700, %v1702
    %v1704 = vrot.slane %v1128, 2
    %v1705 = vrot.slane %v1134, 2
    %v1706 = vsel %vm1693, %v1704, %v1705
    %v1707 = vrot.slane %v1140, 2
    %v1708 = vsel %vm1693, %v1705, %v1707
    %v1709 = vrot.slane %v1158, 2
    %v1710 = vrot.slane %v1164, 2
    %v1711 = vsel %vm1693, %v1709, %v1710
    %v1712 = vrot.slane %v1170, 2
    %v1713 = vsel %vm1693, %v1710, %v1712
    %v1714 = vrot.slane %v1188, 2
    %v1715 = vrot.slane %v1194, 2
    %v1716 = vsel %vm1693, %v1714, %v1715
    %v1717 = vrot.slane %v1200, 2
    %v1718 = vsel %vm1693, %v1715, %v1717
    %v1719 = vrot.slane %v1218, 2
    %v1720 = vrot.slane %v1224, 2
    %v1721 = vsel %vm1693, %v1719, %v1720
    %v1722 = vrot.slane %v1230, 2
    %v1723 = vsel %vm1693, %v1720, %v1722
    %v1724 = vrot.slane %v1248, 2
    %v1725 = vrot.slane %v1254, 2
    %v1726 = vsel %vm1693, %v1724, %v1725
    %v1727 = vrot.slane %v1260, 2
    %v1728 = vsel %vm1693, %v1725, %v1727
    %v1729 = vrot.slane %v1278, 2
    %v1730 = vrot.slane %v1284, 2
    %v1731 = vsel %vm1693, %v1729, %v1730
    %v1732 = vrot.slane %v1290, 2
    %v1733 = vsel %vm1693, %v1730, %v1732
    %v1758 = vadd.f32 %v1645, %v1696
    %v1759 = vadd.f32 %v1646, %v1698
    %v1760 = vadd.f32 %v1647, %v1697
    %v1761 = vadd.f32 %v1648, %v1701
    %v1762 = vadd.f32 %v1649, %v1703
    %v1763 = vadd.f32 %v1650, %v1702
    %v1764 = vadd.f32 %v1651, %v1706
    %v1765 = vadd.f32 %v1652, %v1708
    %v1766 = vadd.f32 %v1653, %v1707
    %v1767 = vadd.f32 %v1654, %v1711
    %v1768 = vadd.f32 %v1655, %v1713
    %v1769 = vadd.f32 %v1656, %v1712
    %v1770 = vadd.f32 %v1657, %v1716
    %v1771 = vadd.f32 %v1658, %v1718
    %v1772 = vadd.f32 %v1659, %v1717
    %v1773 = vadd.f32 %v1660, %v1721
    %v1774 = vadd.f32 %v1661, %v1723
    %v1775 = vadd.f32 %v1662, %v1722
    %v1776 = vadd.f32 %v1663, %v1726
    %v1777 = vadd.f32 %v1664, %v1728
    %v1778 = vadd.f32 %v1665, %v1727
    %v1779 = vadd.f32 %v1666, %v1731
    %v1780 = vadd.f32 %v1667, %v1733
    %v1781 = vadd.f32 %v1668, %v1732
    %vm1806 = vcmask 1044480
    %v1807 = vrot.slane %v1070, 3
    %v1808 = vrot.slane %v1076, 3
    %v1809 = vsel %vm1806, %v1807, %v1808
    %v1810 = vrot.slane %v1082, 3
    %v1811 = vsel %vm1806, %v1808, %v1810
    %v1812 = vrot.slane %v1100, 3
    %v1813 = vrot.slane %v1106, 3
    %v1814 = vsel %vm1806, %v1812, %v1813
    %v1815 = vrot.slane %v1112, 3
    %v1816 = vsel %vm1806, %v1813, %v1815
    %v1817 = vrot.slane %v1130, 3
    %v1818 = vrot.slane %v1136, 3
    %v1819 = vsel %vm1806, %v1817, %v1818
    %v1820 = vrot.slane %v1142, 3
    %v1821 = vsel %vm1806, %v1818, %v1820
    %v1822 = vrot.slane %v1160, 3
    %v1823 = vrot.slane %v1166, 3
    %v1824 = vsel %vm1806, %v1822, %v1823
    %v1825 = vrot.slane %v1172, 3
    %v1826 = vsel %vm1806, %v1823, %v1825
    %v1827 = vrot.slane %v1190, 3
    %v1828 = vrot.slane %v1196, 3
    %v1829 = vsel %vm1806, %v1827, %v1828
    %v1830 = vrot.slane %v1202, 3
    %v1831 = vsel %vm1806, %v1828, %v1830
    %v1832 = vrot.slane %v1220, 3
    %v1833 = vrot.slane %v1226, 3
    %v1834 = vsel %vm1806, %v1832, %v1833
    %v1835 = vrot.slane %v1232, 3
    %v1836 = vsel %vm1806, %v1833, %v1835
    %v1837 = vrot.slane %v1250, 3
    %v1838 = vrot.slane %v1256, 3
    %v1839 = vsel %vm1806, %v1837, %v1838
    %v1840 = vrot.slane %v1262, 3
    %v1841 = vsel %vm1806, %v1838, %v1840
    %v1842 = vrot.slane %v1280, 3
    %v1843 = vrot.slane %v1286, 3
    %v1844 = vsel %vm1806, %v1842, %v1843
    %v1845 = vrot.slane %v1292, 3
    %v1846 = vsel %vm1806, %v1843, %v1845
    %v1871 = vadd.f32 %v1758, %v1809
    %v1872 = vadd.f32 %v1759, %v1811
    %v1873 = vadd.f32 %v1760, %v1810
    %v1874 = vadd.f32 %v1761, %v1814
    %v1875 = vadd.f32 %v1762, %v1816
    %v1876 = vadd.f32 %v1763, %v1815
    %v1877 = vadd.f32 %v1764, %v1819
    %v1878 = vadd.f32 %v1765, %v1821
    %v1879 = vadd.f32 %v1766, %v1820
    %v1880 = vadd.f32 %v1767, %v1824
    %v1881 = vadd.f32 %v1768, %v1826
    %v1882 = vadd.f32 %v1769, %v1825
    %v1883 = vadd.f32 %v1770, %v1829
    %v1884 = vadd.f32 %v1771, %v1831
    %v1885 = vadd.f32 %v1772, %v1830
    %v1886 = vadd.f32 %v1773, %v1834
    %v1887 = vadd.f32 %v1774, %v1836
    %v1888 = vadd.f32 %v1775, %v1835
    %v1889 = vadd.f32 %v1776, %v1839
    %v1890 = vadd.f32 %v1777, %v1841
    %v1891 = vadd.f32 %v1778, %v1840
    %v1892 = vadd.f32 %v1779, %v1844
    %v1893 = vadd.f32 %v1780, %v1846
    %v1894 = vadd.f32 %v1781, %v1845
    %vm1911 = vcmask 1043456
    %v1912 = vrot.slane %v1377, 4
    %v1913 = vrot.slane %v1382, 4
    %v1914 = vsel %vm1911, %v1912, %v1913
    %v1915 = vrot.slane %v1400, 4
    %v1916 = vrot.slane %v1405, 4
    %v1917 = vsel %vm1911, %v1915, %v1916
    %v1918 = vrot.slane %v1423, 4
    %v1919 = vrot.slane %v1428, 4
    %v1920 = vsel %vm1911, %v1918, %v1919
    %v1921 = vrot.slane %v1446, 4
    %v1922 = vrot.slane %v1451, 4
    %v1923 = vsel %vm1911, %v1921, %v1922
    %v1924 = vrot.slane %v1469, 4
    %v1925 = vrot.slane %v1474, 4
    %v1926 = vsel %vm1911, %v1924, %v1925
    %v1927 = vrot.slane %v1492, 4
    %v1928 = vrot.slane %v1497, 4
    %v1929 = vsel %vm1911, %v1927, %v1928
    %v1930 = vrot.slane %v1515, 4
    %v1931 = vrot.slane %v1520, 4
    %v1932 = vsel %vm1911, %v1930, %v1931
    %v1933 = vrot.slane %v1538, 4
    %v1934 = vrot.slane %v1543, 4
    %v1935 = vsel %vm1911, %v1933, %v1934
    %v1960 = vadd.f32 %v1871, %v1912
    %v1961 = vadd.f32 %v1872, %v1914
    %v1962 = vadd.f32 %v1873, %v1913
    %v1963 = vadd.f32 %v1874, %v1915
    %v1964 = vadd.f32 %v1875, %v1917
    %v1965 = vadd.f32 %v1876, %v1916
    %v1966 = vadd.f32 %v1877, %v1918
    %v1967 = vadd.f32 %v1878, %v1920
    %v1968 = vadd.f32 %v1879, %v1919
    %v1969 = vadd.f32 %v1880, %v1921
    %v1970 = vadd.f32 %v1881, %v1923
    %v1971 = vadd.f32 %v1882, %v1922
    %v1972 = vadd.f32 %v1883, %v1924
    %v1973 = vadd.f32 %v1884, %v1926
    %v1974 = vadd.f32 %v1885, %v1925
    %v1975 = vadd.f32 %v1886, %v1927
    %v1976 = vadd.f32 %v1887, %v1929
    %v1977 = vadd.f32 %v1888, %v1928
    %v1978 = vadd.f32 %v1889, %v1930
    %v1979 = vadd.f32 %v1890, %v1932
    %v1980 = vadd.f32 %v1891, %v1931
    %v1981 = vadd.f32 %v1892, %v1933
    %v1982 = vadd.f32 %v1893, %v1935
    %v1983 = vadd.f32 %v1894, %v1934
    %v1985 = vlaneseq
    %v1986 = vshrl.u32 %v1985, 7
    %v1987 = vsub.s32 0, %v1986
    %v1988 = vrot.slane %v1555, %v1987
    %v1990 = vadd.f32 %v1960, %v1988
    %v1991 = vadd.f32 %v1961, %v1988
    %v1992 = vadd.f32 %v1962, %v1988
    %v1993 = vadd.f32 %v1963, %v1988
    %v1994 = vadd.f32 %v1964, %v1988
    %v1995 = vadd.f32 %v1965, %v1988
    %v1996 = vadd.f32 %v1966, %v1988
    %v1997 = vadd.f32 %v1967, %v1988
    %v1998 = vadd.f32 %v1968, %v1988
    %v1999 = vadd.f32 %v1969, %v1988
    %v2000 = vadd.f32 %v1970, %v1988
    %v2001 = vadd.f32 %v1971, %v1988
    %v2002 = vadd.f32 %v1972, %v1988
    %v2003 = vadd.f32 %v1973, %v1988
    %v2004 = vadd.f32 %v1974, %v1988
    %v2005 = vadd.f32 %v1975, %v1988
    %v2006 = vadd.f32 %v1976, %v1988
    %v2007 = vadd.f32 %v1977, %v1988
    %v2008 = vadd.f32 %v1978, %v1988
    %v2009 = vadd.f32 %v1979, %v1988
    %v2010 = vadd.f32 %v1980, %v1988
    %v2011 = vadd.f32 %v1981, %v1988
    %v2012 = vadd.f32 %v1982, %v1988
    %v2013 = vadd.f32 %v1983, %v1988
    %v2030 = vrot.slane %v1088, 1
    %v2031 = vrot.slane %v1094, 1
    %v2032 = vsel %vm1580, %v2030, %v2031
    %v2033 = vrot.slane %v1118, 1
    %v2034 = vrot.slane %v1124, 1
    %v2035 = vsel %vm1580, %v2033, %v2034
    %v2036 = vrot.slane %v1148, 1
    %v2037 = vrot.slane %v1154, 1
    %v2038 = vsel %vm1580, %v2036, %v2037
    %v2039 = vrot.slane %v1178, 1
    %v2040 = vrot.slane %v1184, 1
    %v2041 = vsel %vm1580, %v2039, %v2040
    %v2042 = vrot.slane %v1208, 1
    %v2043 = vrot.slane %v1214, 1
    %v2044 = vsel %vm1580, %v2042, %v2043
    %v2045 = vrot.slane %v1238, 1
    %v2046 = vrot.slane %v1244, 1
    %v2047 = vsel %vm1580, %v2045, %v2046
    %v2048 = vrot.slane %v1268, 1
    %v2049 = vrot.slane %v1274, 1
    %v2050 = vsel %vm1580, %v2048, %v2049
    %v2051 = vrot.slane %v1298, 1
    %v2052 = vrot.slane %v1304, 1
    %v2053 = vsel %vm1580, %v2051, %v2052
    %v2070 = vadd.f32 %v1086, %v2032
    %v2071 = vadd.f32 %v1092, %v2031
    %v2072 = vadd.f32 %v1116, %v2035
    %v2073 = vadd.f32 %v1122, %v2034
    %v2074 = vadd.f32 %v1146, %v2038
    %v2075 = vadd.f32 %v1152, %v2037
    %v2076 = vadd.f32 %v1176, %v2041
    %v2077 = vadd.f32 %v1182, %v2040
    %v2078 = vadd.f32 %v1206, %v2044
    %v2079 = vadd.f32 %v1212, %v2043
    %v2080 = vadd.f32 %v1236, %v2047
    %v2081 = vadd.f32 %v1242, %v2046
    %v2082 = vadd.f32 %v1266, %v2050
    %v2083 = vadd.f32 %v1272, %v2049
    %v2084 = vadd.f32 %v1296, %v2053
    %v2085 = vadd.f32 %v1302, %v2052
    %v2094 = vrot.slane %v1391, 2
    %v2095 = vrot.slane %v1414, 2
    %v2096 = vrot.slane %v1437, 2
    %v2097 = vrot.slane %v1460, 2
    %v2098 = vrot.slane %v1483, 2
    %v2099 = vrot.slane %v1506, 2
    %v2100 = vrot.slane %v1529, 2
    %v2101 = vrot.slane %v1552, 2
    %v2110 = vadd.f32 %v2070, %v2094
    %v2111 = vadd.f32 %v2071, %v2094
    %v2112 = vadd.f32 %v2072, %v2095
    %v2113 = vadd.f32 %v2073, %v2095
    %v2114 = vadd.f32 %v2074, %v2096
    %v2115 = vadd.f32 %v2075, %v2096
    %v2116 = vadd.f32 %v2076, %v2097
    %v2117 = vadd.f32 %v2077, %v2097
    %v2118 = vadd.f32 %v2078, %v2098
    %v2119 = vadd.f32 %v2079, %v2098
    %v2120 = vadd.f32 %v2080, %v2099
    %v2121 = vadd.f32 %v2081, %v2099
    %v2122 = vadd.f32 %v2082, %v2100
    %v2123 = vadd.f32 %v2083, %v2100
    %v2124 = vadd.f32 %v2084, %v2101
    %v2125 = vadd.f32 %v2085, %v2101
    %v2126 = vadd.f32 %v2110, %v1988
    %v2127 = vadd.f32 %v2111, %v1988
    %v2128 = vadd.f32 %v2112, %v1988
    %v2129 = vadd.f32 %v2113, %v1988
    %v2130 = vadd.f32 %v2114, %v1988
    %v2131 = vadd.f32 %v2115, %v1988
    %v2132 = vadd.f32 %v2116, %v1988
    %v2133 = vadd.f32 %v2117, %v1988
    %v2134 = vadd.f32 %v2118, %v1988
    %v2135 = vadd.f32 %v2119, %v1988
    %v2136 = vadd.f32 %v2120, %v1988
    %v2137 = vadd.f32 %v2121, %v1988
    %v2138 = vadd.f32 %v2122, %v1988
    %v2139 = vadd.f32 %v2123, %v1988
    %v2140 = vadd.f32 %v2124, %v1988
    %v2141 = vadd.f32 %v2125, %v1988
    %v2142 = vmax.f32 %v2126, 0.0
    %v2143 = vmax.f32 %v2127, 0.0
    %v2144 = vmax.f32 %v2128, 0.0
    %v2145 = vmax.f32 %v2129, 0.0
    %v2146 = vmax.f32 %v2130, 0.0
    %v2147 = vmax.f32 %v2131, 0.0
    %v2148 = vmax.f32 %v2132, 0.0
    %v2149 = vmax.f32 %v2133, 0.0
    %v2150 = vmax.f32 %v2134, 0.0
    %v2151 = vmax.f32 %v2135, 0.0
    %v2152 = vmax.f32 %v2136, 0.0
    %v2153 = vmax.f32 %v2137, 0.0
    %v2154 = vmax.f32 %v2138, 0.0
    %v2155 = vmax.f32 %v2139, 0.0
    %v2156 = vmax.f32 %v2140, 0.0
    %v2157 = vmax.f32 %v2141, 0.0
    %vm2158 = vcmask 1047558
    %v2159 = vsel %vm2158, %v2142, -inf
    %v2160 = vsel %vm1693, %v2143, -inf
    %v2161 = vmax.f32 %v2159, %v2160
    %v2162 = vrot.slane %v2161, 4
    %v2163 = vmax.f32 %v2161, %v2162
    %v2164 = vrot.slane %v2163, 2
    %v2165 = vmax.f32 %v2163, %v2164
    %v2166 = vrot.slane %v2165, 1
    %v2167 = vmax.f32 %v2165, %v2166
    %v2168 = vsel %vm2158, %v2144, -inf
    %v2169 = vsel %vm1693, %v2145, -inf
    %v2170 = vmax.f32 %v2168, %v2169
    %v2171 = vrot.slane %v2170, 4
    %v2172 = vmax.f32 %v2170, %v2171
    %v2173 = vrot.slane %v2172, 2
    %v2174 = vmax.f32 %v2172, %v2173
    %v2175 = vrot.slane %v2174, 1
    %v2176 = vmax.f32 %v2174, %v2175
    %v2177 = vsel %vm2158, %v2146, -inf
    %v2178 = vsel %vm1693, %v2147, -inf
    %v2179 = vmax.f32 %v2177, %v2178
    %v2180 = vrot.slane %v2179, 4
    %v2181 = vmax.f32 %v2179, %v2180
    %v2182 = vrot.slane %v2181, 2
    %v2183 = vmax.f32 %v2181, %v2182
    %v2184 = vrot.slane %v2183, 1
    %v2185 = vmax.f32 %v2183, %v2184
    %v2186 = vsel %vm2158, %v2148, -inf
    %v2187 = vsel %vm1693, %v2149, -inf
    %v2188 = vmax.f32 %v2186, %v2187
    %v2189 = vrot.slane %v2188, 4
    %v2190 = vmax.f32 %v2188, %v2189
    %v2191 = vrot.slane %v2190, 2
    %v2192 = vmax.f32 %v2190, %v2191
    %v2193 = vrot.slane %v2192, 1
    %v2194 = vmax.f32 %v2192, %v2193
    %v2195 = vsel %vm2158, %v2150, -inf
    %v2196 = vsel %vm1693, %v2151, -inf
    %v2197 = vmax.f32 %v2195, %v2196
    %v2198 = vrot.slane %v2197, 4
    %v2199 = vmax.f32 %v2197, %v2198
    %v2200 = vrot.slane %v2199, 2
    %v2201 = vmax.f32 %v2199, %v2200
    %v2202 = vrot.slane %v2201, 1
    %v2203 = vmax.f32 %v2201, %v2202
    %v2204 = vsel %vm2158, %v2152, -inf
    %v2205 = vsel %vm1693, %v2153, -inf
    %v2206 = vmax.f32 %v2204, %v2205
    %v2207 = vrot.slane %v2206, 4
    %v2208 = vmax.f32 %v2206, %v2207
    %v2209 = vrot.slane %v2208, 2
    %v2210 = vmax.f32 %v2208, %v2209
    %v2211 = vrot.slane %v2210, 1
    %v2212 = vmax.f32 %v2210, %v2211
    %v2213 = vsel %vm2158, %v2154, -inf
    %v2214 = vsel %vm1693, %v2155, -inf
    %v2215 = vmax.f32 %v2213, %v2214
    %v2216 = vrot.slane %v2215, 4
    %v2217 = vmax.f32 %v2215, %v2216
    %v2218 = vrot.slane %v2217, 2
    %v2219 = vmax.f32 %v2217, %v2218
    %v2220 = vrot.slane %v2219, 1
    %v2221 = vmax.f32 %v2219, %v2220
    %v2222 = vsel %vm2158, %v2156, -inf
    %v2223 = vsel %vm1693, %v2157, -inf
    %v2224 = vmax.f32 %v2222, %v2223
    %v2225 = vrot.slane %v2224, 4
    %v2226 = vmax.f32 %v2224, %v2225
    %v2227 = vrot.slane %v2226, 2
    %v2228 = vmax.f32 %v2226, %v2227
    %v2229 = vrot.slane %v2228, 1
    %v2230 = vmax.f32 %v2228, %v2229
    %2239 = vrot.lane.b32.xlu0 %v2167, 80
    %v2240 = vpop.permute.xlu0 %2239
    %2241 = vrot.lane.b32.xlu0 %v2176, 80
    %v2242 = vpop.permute.xlu0 %2241
    %2243 = vrot.lane.b32.xlu0 %v2185, 80
    %v2244 = vpop.permute.xlu0 %2243
    %2245 = vrot.lane.b32.xlu0 %v2194, 80
    %v2246 = vpop.permute.xlu0 %2245
    %2247 = vrot.lane.b32.xlu0 %v2203, 80
    %v2248 = vpop.permute.xlu0 %2247
    %2249 = vrot.lane.b32.xlu0 %v2212, 80
    %v2250 = vpop.permute.xlu0 %2249
    %2251 = vrot.lane.b32.xlu0 %v2221, 80
    %v2252 = vpop.permute.xlu0 %2251
    %2253 = vrot.lane.b32.xlu0 %v2230, 80
    %v2254 = vpop.permute.xlu0 %2253
    %2263 = vrot.lane.b32.xlu0 %v2167, 88
    %v2264 = vpop.permute.xlu0 %2263
    %2265 = vrot.lane.b32.xlu0 %v2176, 88
    %v2266 = vpop.permute.xlu0 %2265
    %2267 = vrot.lane.b32.xlu0 %v2185, 88
    %v2268 = vpop.permute.xlu0 %2267
    %2269 = vrot.lane.b32.xlu0 %v2194, 88
    %v2270 = vpop.permute.xlu0 %2269
    %2271 = vrot.lane.b32.xlu0 %v2203, 88
    %v2272 = vpop.permute.xlu0 %2271
    %2273 = vrot.lane.b32.xlu0 %v2212, 88
    %v2274 = vpop.permute.xlu0 %2273
    %2275 = vrot.lane.b32.xlu0 %v2221, 88
    %v2276 = vpop.permute.xlu0 %2275
    %2277 = vrot.lane.b32.xlu0 %v2230, 88
    %v2278 = vpop.permute.xlu0 %2277
    %2287 = vrot.lane.b32.xlu0 %v2167, 96
    %v2288 = vpop.permute.xlu0 %2287
    %2289 = vrot.lane.b32.xlu0 %v2176, 96
    %v2290 = vpop.permute.xlu0 %2289
    %2291 = vrot.lane.b32.xlu0 %v2185, 96
    %v2292 = vpop.permute.xlu0 %2291
    %2293 = vrot.lane.b32.xlu0 %v2194, 96
    %v2294 = vpop.permute.xlu0 %2293
    %2295 = vrot.lane.b32.xlu0 %v2203, 96
    %v2296 = vpop.permute.xlu0 %2295
    %2297 = vrot.lane.b32.xlu0 %v2212, 96
    %v2298 = vpop.permute.xlu0 %2297
    %2299 = vrot.lane.b32.xlu0 %v2221, 96
    %v2300 = vpop.permute.xlu0 %2299
    %2301 = vrot.lane.b32.xlu0 %v2230, 96
    %v2302 = vpop.permute.xlu0 %2301
    %2311 = vrot.lane.b32.xlu0 %v2167, 104
    %v2312 = vpop.permute.xlu0 %2311
    %2313 = vrot.lane.b32.xlu0 %v2176, 104
    %v2314 = vpop.permute.xlu0 %2313
    %2315 = vrot.lane.b32.xlu0 %v2185, 104
    %v2316 = vpop.permute.xlu0 %2315
    %2317 = vrot.lane.b32.xlu0 %v2194, 104
    %v2318 = vpop.permute.xlu0 %2317
    %2319 = vrot.lane.b32.xlu0 %v2203, 104
    %v2320 = vpop.permute.xlu0 %2319
    %2321 = vrot.lane.b32.xlu0 %v2212, 104
    %v2322 = vpop.permute.xlu0 %2321
    %2323 = vrot.lane.b32.xlu0 %v2221, 104
    %v2324 = vpop.permute.xlu0 %2323
    %2325 = vrot.lane.b32.xlu0 %v2230, 104
    %v2326 = vpop.permute.xlu0 %2325
    %2335 = vrot.lane.b32.xlu0 %v2167, 112
    %v2336 = vpop.permute.xlu0 %2335
    %2337 = vrot.lane.b32.xlu0 %v2176, 112
    %v2338 = vpop.permute.xlu0 %2337
    %2339 = vrot.lane.b32.xlu0 %v2185, 112
    %v2340 = vpop.permute.xlu0 %2339
    %2341 = vrot.lane.b32.xlu0 %v2194, 112
    %v2342 = vpop.permute.xlu0 %2341
    %2343 = vrot.lane.b32.xlu0 %v2203, 112
    %v2344 = vpop.permute.xlu0 %2343
    %2345 = vrot.lane.b32.xlu0 %v2212, 112
    %v2346 = vpop.permute.xlu0 %2345
    %2347 = vrot.lane.b32.xlu0 %v2221, 112
    %v2348 = vpop.permute.xlu0 %2347
    %2349 = vrot.lane.b32.xlu0 %v2230, 112
    %v2350 = vpop.permute.xlu0 %2349
    %2359 = vrot.lane.b32.xlu0 %v2167, 120
    %v2360 = vpop.permute.xlu0 %2359
    %2361 = vrot.lane.b32.xlu0 %v2176, 120
    %v2362 = vpop.permute.xlu0 %2361
    %2363 = vrot.lane.b32.xlu0 %v2185, 120
    %v2364 = vpop.permute.xlu0 %2363
    %2365 = vrot.lane.b32.xlu0 %v2194, 120
    %v2366 = vpop.permute.xlu0 %2365
    %2367 = vrot.lane.b32.xlu0 %v2203, 120
    %v2368 = vpop.permute.xlu0 %2367
    %2369 = vrot.lane.b32.xlu0 %v2212, 120
    %v2370 = vpop.permute.xlu0 %2369
    %2371 = vrot.lane.b32.xlu0 %v2221, 120
    %v2372 = vpop.permute.xlu0 %2371
    %2373 = vrot.lane.b32.xlu0 %v2230, 120
    %v2374 = vpop.permute.xlu0 %2373
    %2383 = vrot.lane.b32.xlu0 %v2167, 8
    %v2384 = vpop.permute.xlu0 %2383
    %2385 = vrot.lane.b32.xlu0 %v2176, 8
    %v2386 = vpop.permute.xlu0 %2385
    %2387 = vrot.lane.b32.xlu0 %v2185, 8
    %v2388 = vpop.permute.xlu0 %2387
    %2389 = vrot.lane.b32.xlu0 %v2194, 8
    %v2390 = vpop.permute.xlu0 %2389
    %2391 = vrot.lane.b32.xlu0 %v2203, 8
    %v2392 = vpop.permute.xlu0 %2391
    %2393 = vrot.lane.b32.xlu0 %v2212, 8
    %v2394 = vpop.permute.xlu0 %2393
    %2395 = vrot.lane.b32.xlu0 %v2221, 8
    %v2396 = vpop.permute.xlu0 %2395
    %2397 = vrot.lane.b32.xlu0 %v2230, 8
    %v2398 = vpop.permute.xlu0 %2397
    %2407 = vrot.lane.b32.xlu0 %v2167, 16
    %v2408 = vpop.permute.xlu0 %2407
    %2409 = vrot.lane.b32.xlu0 %v2176, 16
    %v2410 = vpop.permute.xlu0 %2409
    %2411 = vrot.lane.b32.xlu0 %v2185, 16
    %v2412 = vpop.permute.xlu0 %2411
    %2413 = vrot.lane.b32.xlu0 %v2194, 16
    %v2414 = vpop.permute.xlu0 %2413
    %2415 = vrot.lane.b32.xlu0 %v2203, 16
    %v2416 = vpop.permute.xlu0 %2415
    %2417 = vrot.lane.b32.xlu0 %v2212, 16
    %v2418 = vpop.permute.xlu0 %2417
    %2419 = vrot.lane.b32.xlu0 %v2221, 16
    %v2420 = vpop.permute.xlu0 %2419
    %2421 = vrot.lane.b32.xlu0 %v2230, 16
    %v2422 = vpop.permute.xlu0 %2421
    %2431 = vrot.lane.b32.xlu0 %v2167, 24
    %v2432 = vpop.permute.xlu0 %2431
    %2433 = vrot.lane.b32.xlu0 %v2176, 24
    %v2434 = vpop.permute.xlu0 %2433
    %2435 = vrot.lane.b32.xlu0 %v2185, 24
    %v2436 = vpop.permute.xlu0 %2435
    %2437 = vrot.lane.b32.xlu0 %v2194, 24
    %v2438 = vpop.permute.xlu0 %2437
    %2439 = vrot.lane.b32.xlu0 %v2203, 24
    %v2440 = vpop.permute.xlu0 %2439
    %2441 = vrot.lane.b32.xlu0 %v2212, 24
    %v2442 = vpop.permute.xlu0 %2441
    %2443 = vrot.lane.b32.xlu0 %v2221, 24
    %v2444 = vpop.permute.xlu0 %2443
    %2445 = vrot.lane.b32.xlu0 %v2230, 24
    %v2446 = vpop.permute.xlu0 %2445
    %2455 = vrot.lane.b32.xlu0 %v2167, 32
    %v2456 = vpop.permute.xlu0 %2455
    %2457 = vrot.lane.b32.xlu0 %v2176, 32
    %v2458 = vpop.permute.xlu0 %2457
    %2459 = vrot.lane.b32.xlu0 %v2185, 32
    %v2460 = vpop.permute.xlu0 %2459
    %2461 = vrot.lane.b32.xlu0 %v2194, 32
    %v2462 = vpop.permute.xlu0 %2461
    %2463 = vrot.lane.b32.xlu0 %v2203, 32
    %v2464 = vpop.permute.xlu0 %2463
    %2465 = vrot.lane.b32.xlu0 %v2212, 32
    %v2466 = vpop.permute.xlu0 %2465
    %2467 = vrot.lane.b32.xlu0 %v2221, 32
    %v2468 = vpop.permute.xlu0 %2467
    %2469 = vrot.lane.b32.xlu0 %v2230, 32
    %v2470 = vpop.permute.xlu0 %2469
    %2479 = vrot.lane.b32.xlu0 %v2167, 40
    %v2480 = vpop.permute.xlu0 %2479
    %2481 = vrot.lane.b32.xlu0 %v2176, 40
    %v2482 = vpop.permute.xlu0 %2481
    %2483 = vrot.lane.b32.xlu0 %v2185, 40
    %v2484 = vpop.permute.xlu0 %2483
    %2485 = vrot.lane.b32.xlu0 %v2194, 40
    %v2486 = vpop.permute.xlu0 %2485
    %2487 = vrot.lane.b32.xlu0 %v2203, 40
    %v2488 = vpop.permute.xlu0 %2487
    %2489 = vrot.lane.b32.xlu0 %v2212, 40
    %v2490 = vpop.permute.xlu0 %2489
    %2491 = vrot.lane.b32.xlu0 %v2221, 40
    %v2492 = vpop.permute.xlu0 %2491
    %2493 = vrot.lane.b32.xlu0 %v2230, 40
    %v2494 = vpop.permute.xlu0 %2493
    %2503 = vrot.lane.b32.xlu0 %v2167, 48
    %v2504 = vpop.permute.xlu0 %2503
    %2505 = vrot.lane.b32.xlu0 %v2176, 48
    %v2506 = vpop.permute.xlu0 %2505
    %2507 = vrot.lane.b32.xlu0 %v2185, 48
    %v2508 = vpop.permute.xlu0 %2507
    %2509 = vrot.lane.b32.xlu0 %v2194, 48
    %v2510 = vpop.permute.xlu0 %2509
    %2511 = vrot.lane.b32.xlu0 %v2203, 48
    %v2512 = vpop.permute.xlu0 %2511
    %2513 = vrot.lane.b32.xlu0 %v2212, 48
    %v2514 = vpop.permute.xlu0 %2513
    %2515 = vrot.lane.b32.xlu0 %v2221, 48
    %v2516 = vpop.permute.xlu0 %2515
    %2517 = vrot.lane.b32.xlu0 %v2230, 48
    %v2518 = vpop.permute.xlu0 %2517
    %2527 = vrot.lane.b32.xlu0 %v2167, 56
    %v2528 = vpop.permute.xlu0 %2527
    %2529 = vrot.lane.b32.xlu0 %v2176, 56
    %v2530 = vpop.permute.xlu0 %2529
    %2531 = vrot.lane.b32.xlu0 %v2185, 56
    %v2532 = vpop.permute.xlu0 %2531
    %2533 = vrot.lane.b32.xlu0 %v2194, 56
    %v2534 = vpop.permute.xlu0 %2533
    %2535 = vrot.lane.b32.xlu0 %v2203, 56
    %v2536 = vpop.permute.xlu0 %2535
    %2537 = vrot.lane.b32.xlu0 %v2212, 56
    %v2538 = vpop.permute.xlu0 %2537
    %2539 = vrot.lane.b32.xlu0 %v2221, 56
    %v2540 = vpop.permute.xlu0 %2539
    %2541 = vrot.lane.b32.xlu0 %v2230, 56
    %v2542 = vpop.permute.xlu0 %2541
    %2551 = vrot.lane.b32.xlu0 %v2167, 64
    %v2552 = vpop.permute.xlu0 %2551
    %2553 = vrot.lane.b32.xlu0 %v2176, 64
    %v2554 = vpop.permute.xlu0 %2553
    %2555 = vrot.lane.b32.xlu0 %v2185, 64
    %v2556 = vpop.permute.xlu0 %2555
    %2557 = vrot.lane.b32.xlu0 %v2194, 64
    %v2558 = vpop.permute.xlu0 %2557
    %2559 = vrot.lane.b32.xlu0 %v2203, 64
    %v2560 = vpop.permute.xlu0 %2559
    %2561 = vrot.lane.b32.xlu0 %v2212, 64
    %v2562 = vpop.permute.xlu0 %2561
    %2563 = vrot.lane.b32.xlu0 %v2221, 64
    %v2564 = vpop.permute.xlu0 %2563
    %2565 = vrot.lane.b32.xlu0 %v2230, 64
    %v2566 = vpop.permute.xlu0 %2565
    %2575 = vrot.lane.b32.xlu0 %v2167, 72
    %v2576 = vpop.permute.xlu0 %2575
    %2577 = vrot.lane.b32.xlu0 %v2176, 72
    %v2578 = vpop.permute.xlu0 %2577
    %2579 = vrot.lane.b32.xlu0 %v2185, 72
    %v2580 = vpop.permute.xlu0 %2579
    %2581 = vrot.lane.b32.xlu0 %v2194, 72
    %v2582 = vpop.permute.xlu0 %2581
    %2583 = vrot.lane.b32.xlu0 %v2203, 72
    %v2584 = vpop.permute.xlu0 %2583
    %2585 = vrot.lane.b32.xlu0 %v2212, 72
    %v2586 = vpop.permute.xlu0 %2585
    %2587 = vrot.lane.b32.xlu0 %v2221, 72
    %v2588 = vpop.permute.xlu0 %2587
    %2589 = vrot.lane.b32.xlu0 %v2230, 72
    %v2590 = vpop.permute.xlu0 %2589
    %vm2599 = vcmask 64512
    %v2600 = vsel %vm2599, %v2240, %v2264
    %v2601 = vsel %vm2599, %v2242, %v2266
    %v2602 = vsel %vm2599, %v2244, %v2268
    %v2603 = vsel %vm2599, %v2246, %v2270
    %v2604 = vsel %vm2599, %v2248, %v2272
    %v2605 = vsel %vm2599, %v2250, %v2274
    %v2606 = vsel %vm2599, %v2252, %v2276
    %v2607 = vsel %vm2599, %v2254, %v2278
    %vm2608 = vcmask 130048
    %v2609 = vsel %vm2608, %v2600, %v2288
    %v2610 = vsel %vm2608, %v2601, %v2290
    %v2611 = vsel %vm2608, %v2602, %v2292
    %v2612 = vsel %vm2608, %v2603, %v2294
    %v2613 = vsel %vm2608, %v2604, %v2296
    %v2614 = vsel %vm2608, %v2605, %v2298
    %v2615 = vsel %vm2608, %v2606, %v2300
    %v2616 = vsel %vm2608, %v2607, %v2302
    %vm2617 = vcmask 195584
    %v2618 = vsel %vm2617, %v2609, %v2312
    %v2619 = vsel %vm2617, %v2610, %v2314
    %v2620 = vsel %vm2617, %v2611, %v2316
    %v2621 = vsel %vm2617, %v2612, %v2318
    %v2622 = vsel %vm2617, %v2613, %v2320
    %v2623 = vsel %vm2617, %v2614, %v2322
    %v2624 = vsel %vm2617, %v2615, %v2324
    %v2625 = vsel %vm2617, %v2616, %v2326
    %v2626 = vsel %vm607, %v2618, %v2336
    %v2627 = vsel %vm607, %v2619, %v2338
    %v2628 = vsel %vm607, %v2620, %v2340
    %v2629 = vsel %vm607, %v2621, %v2342
    %v2630 = vsel %vm607, %v2622, %v2344
    %v2631 = vsel %vm607, %v2623, %v2346
    %v2632 = vsel %vm607, %v2624, %v2348
    %v2633 = vsel %vm607, %v2625, %v2350
    %vm2634 = vcmask 326656
    %v2635 = vsel %vm2634, %v2626, %v2360
    %v2636 = vsel %vm2634, %v2627, %v2362
    %v2637 = vsel %vm2634, %v2628, %v2364
    %v2638 = vsel %vm2634, %v2629, %v2366
    %v2639 = vsel %vm2634, %v2630, %v2368
    %v2640 = vsel %vm2634, %v2631, %v2370
    %v2641 = vsel %vm2634, %v2632, %v2372
    %v2642 = vsel %vm2634, %v2633, %v2374
    %vm2643 = vcmask 392192
    %v2644 = vsel %vm2643, %v2635, %v2167
    %v2645 = vsel %vm2643, %v2636, %v2176
    %v2646 = vsel %vm2643, %v2637, %v2185
    %v2647 = vsel %vm2643, %v2638, %v2194
    %v2648 = vsel %vm2643, %v2639, %v2203
    %v2649 = vsel %vm2643, %v2640, %v2212
    %v2650 = vsel %vm2643, %v2641, %v2221
    %v2651 = vsel %vm2643, %v2642, %v2230
    %vm2652 = vcmask 457728
    %v2653 = vsel %vm2652, %v2644, %v2384
    %v2654 = vsel %vm2652, %v2645, %v2386
    %v2655 = vsel %vm2652, %v2646, %v2388
    %v2656 = vsel %vm2652, %v2647, %v2390
    %v2657 = vsel %vm2652, %v2648, %v2392
    %v2658 = vsel %vm2652, %v2649, %v2394
    %v2659 = vsel %vm2652, %v2650, %v2396
    %v2660 = vsel %vm2652, %v2651, %v2398
    %vm2661 = vcmask 523264
    %v2662 = vsel %vm2661, %v2653, %v2408
    %v2663 = vsel %vm2661, %v2654, %v2410
    %v2664 = vsel %vm2661, %v2655, %v2412
    %v2665 = vsel %vm2661, %v2656, %v2414
    %v2666 = vsel %vm2661, %v2657, %v2416
    %v2667 = vsel %vm2661, %v2658, %v2418
    %v2668 = vsel %vm2661, %v2659, %v2420
    %v2669 = vsel %vm2661, %v2660, %v2422
    %vm2670 = vcmask 588800
    %v2671 = vsel %vm2670, %v2662, %v2432
    %v2672 = vsel %vm2670, %v2663, %v2434
    %v2673 = vsel %vm2670, %v2664, %v2436
    %v2674 = vsel %vm2670, %v2665, %v2438
    %v2675 = vsel %vm2670, %v2666, %v2440
    %v2676 = vsel %vm2670, %v2667, %v2442
    %v2677 = vsel %vm2670, %v2668, %v2444
    %v2678 = vsel %vm2670, %v2669, %v2446
    %vm2679 = vcmask 654336
    %v2680 = vsel %vm2679, %v2671, %v2456
    %v2681 = vsel %vm2679, %v2672, %v2458
    %v2682 = vsel %vm2679, %v2673, %v2460
    %v2683 = vsel %vm2679, %v2674, %v2462
    %v2684 = vsel %vm2679, %v2675, %v2464
    %v2685 = vsel %vm2679, %v2676, %v2466
    %v2686 = vsel %vm2679, %v2677, %v2468
    %v2687 = vsel %vm2679, %v2678, %v2470
    %vm2688 = vcmask 719872
    %v2689 = vsel %vm2688, %v2680, %v2480
    %v2690 = vsel %vm2688, %v2681, %v2482
    %v2691 = vsel %vm2688, %v2682, %v2484
    %v2692 = vsel %vm2688, %v2683, %v2486
    %v2693 = vsel %vm2688, %v2684, %v2488
    %v2694 = vsel %vm2688, %v2685, %v2490
    %v2695 = vsel %vm2688, %v2686, %v2492
    %v2696 = vsel %vm2688, %v2687, %v2494
    %vm2697 = vcmask 785408
    %v2698 = vsel %vm2697, %v2689, %v2504
    %v2699 = vsel %vm2697, %v2690, %v2506
    %v2700 = vsel %vm2697, %v2691, %v2508
    %v2701 = vsel %vm2697, %v2692, %v2510
    %v2702 = vsel %vm2697, %v2693, %v2512
    %v2703 = vsel %vm2697, %v2694, %v2514
    %v2704 = vsel %vm2697, %v2695, %v2516
    %v2705 = vsel %vm2697, %v2696, %v2518
    %vm2706 = vcmask 850944
    %v2707 = vsel %vm2706, %v2698, %v2528
    %v2708 = vsel %vm2706, %v2699, %v2530
    %v2709 = vsel %vm2706, %v2700, %v2532
    %v2710 = vsel %vm2706, %v2701, %v2534
    %v2711 = vsel %vm2706, %v2702, %v2536
    %v2712 = vsel %vm2706, %v2703, %v2538
    %v2713 = vsel %vm2706, %v2704, %v2540
    %v2714 = vsel %vm2706, %v2705, %v2542
    %vm2715 = vcmask 916480
    %v2716 = vsel %vm2715, %v2707, %v2552
    %v2717 = vsel %vm2715, %v2708, %v2554
    %v2718 = vsel %vm2715, %v2709, %v2556
    %v2719 = vsel %vm2715, %v2710, %v2558
    %v2720 = vsel %vm2715, %v2711, %v2560
    %v2721 = vsel %vm2715, %v2712, %v2562
    %v2722 = vsel %vm2715, %v2713, %v2564
    %v2723 = vsel %vm2715, %v2714, %v2566
    %vm2724 = vcmask 982016
    %v2725 = vsel %vm2724, %v2716, %v2576
    %v2726 = vsel %vm2724, %v2717, %v2578
    %v2727 = vsel %vm2724, %v2718, %v2580
    %v2728 = vsel %vm2724, %v2719, %v2582
    %v2729 = vsel %vm2724, %v2720, %v2584
    %v2730 = vsel %vm2724, %v2721, %v2586
    %v2731 = vsel %vm2724, %v2722, %v2588
    %v2732 = vsel %vm2724, %v2723, %v2590
    %v2733 = vtanh.pop %v1990
    %v2734 = vtanh.pop %v1991
    %v2735 = vtanh.pop %v1992
    %v2736 = vtanh.pop %v1993
    %v2737 = vtanh.pop %v1994
    %v2738 = vtanh.pop %v1995
    %v2739 = vtanh.pop %v1996
    %v2740 = vtanh.pop %v1997
    %v2741 = vtanh.pop %v1998
    %v2742 = vtanh.pop %v1999
    %v2743 = vtanh.pop %v2000
    %v2744 = vtanh.pop %v2001
    %v2745 = vtanh.pop %v2002
    %v2746 = vtanh.pop %v2003
    %v2747 = vtanh.pop %v2004
    %v2748 = vtanh.pop %v2005
    %v2749 = vtanh.pop %v2006
    %v2750 = vtanh.pop %v2007
    %v2751 = vtanh.pop %v2008
    %v2752 = vtanh.pop %v2009
    %v2753 = vtanh.pop %v2010
    %v2754 = vtanh.pop %v2011
    %v2755 = vtanh.pop %v2012
    %v2756 = vtanh.pop %v2013
    %v2757 = vlaneseq
    %v2758 = vshrl.u32 %v2757, 7
    %v2759 = vsub.s32 0, %v2758
    %v2760 = vrot.slane %v2725, %v2759
    %v2761 = vlaneseq
    %v2762 = vshrl.u32 %v2761, 7
    %v2763 = vsub.s32 0, %v2762
    %v2764 = vrot.slane %v2726, %v2763
    %v2765 = vlaneseq
    %v2766 = vshrl.u32 %v2765, 7
    %v2767 = vsub.s32 0, %v2766
    %v2768 = vrot.slane %v2727, %v2767
    %v2769 = vlaneseq
    %v2770 = vshrl.u32 %v2769, 7
    %v2771 = vsub.s32 0, %v2770
    %v2772 = vrot.slane %v2728, %v2771
    %v2773 = vlaneseq
    %v2774 = vshrl.u32 %v2773, 7
    %v2775 = vsub.s32 0, %v2774
    %v2776 = vrot.slane %v2729, %v2775
    %v2777 = vlaneseq
    %v2778 = vshrl.u32 %v2777, 7
    %v2779 = vsub.s32 0, %v2778
    %v2780 = vrot.slane %v2730, %v2779
    %v2781 = vlaneseq
    %v2782 = vshrl.u32 %v2781, 7
    %v2783 = vsub.s32 0, %v2782
    %v2784 = vrot.slane %v2731, %v2783
    %v2785 = vlaneseq
    %v2786 = vshrl.u32 %v2785, 7
    %v2787 = vsub.s32 0, %v2786
    %v2788 = vrot.slane %v2732, %v2787
    %v2789 = vadd.f32 %v1990, %v2760
    %v2790 = vadd.f32 %v1991, %v2760
    %v2791 = vadd.f32 %v1992, %v2760
    %v2792 = vadd.f32 %v1993, %v2764
    %v2793 = vadd.f32 %v1994, %v2764
    %v2794 = vadd.f32 %v1995, %v2764
    %v2795 = vadd.f32 %v1996, %v2768
    %v2796 = vadd.f32 %v1997, %v2768
    %v2797 = vadd.f32 %v1998, %v2768
    %v2798 = vadd.f32 %v1999, %v2772
    %v2799 = vadd.f32 %v2000, %v2772
    %v2800 = vadd.f32 %v2001, %v2772
    %v2801 = vadd.f32 %v2002, %v2776
    %v2802 = vadd.f32 %v2003, %v2776
    %v2803 = vadd.f32 %v2004, %v2776
    %v2804 = vadd.f32 %v2005, %v2780
    %v2805 = vadd.f32 %v2006, %v2780
    %v2806 = vadd.f32 %v2007, %v2780
    %v2807 = vadd.f32 %v2008, %v2784
    %v2808 = vadd.f32 %v2009, %v2784
    %v2809 = vadd.f32 %v2010, %v2784
    %v2810 = vadd.f32 %v2011, %v2788
    %v2811 = vadd.f32 %v2012, %v2788
    %v2812 = vadd.f32 %v2013, %v2788
    %v2813 = vmax.f32 %v2789, 0.0
    %v2814 = vmax.f32 %v2790, 0.0
    %v2815 = vmax.f32 %v2791, 0.0
    %v2816 = vmax.f32 %v2792, 0.0
    %v2817 = vmax.f32 %v2793, 0.0
    %v2818 = vmax.f32 %v2794, 0.0
    %v2819 = vmax.f32 %v2795, 0.0
    %v2820 = vmax.f32 %v2796, 0.0
    %v2821 = vmax.f32 %v2797, 0.0
    %v2822 = vmax.f32 %v2798, 0.0
    %v2823 = vmax.f32 %v2799, 0.0
    %v2824 = vmax.f32 %v2800, 0.0
    %v2825 = vmax.f32 %v2801, 0.0
    %v2826 = vmax.f32 %v2802, 0.0
    %v2827 = vmax.f32 %v2803, 0.0
    %v2828 = vmax.f32 %v2804, 0.0
    %v2829 = vmax.f32 %v2805, 0.0
    %v2830 = vmax.f32 %v2806, 0.0
    %v2831 = vmax.f32 %v2807, 0.0
    %v2832 = vmax.f32 %v2808, 0.0
    %v2833 = vmax.f32 %v2809, 0.0
    %v2834 = vmax.f32 %v2810, 0.0
    %v2835 = vmax.f32 %v2811, 0.0
    %v2836 = vmax.f32 %v2812, 0.0
    %2861 = vrot.lane.b32.xlu0 %v2813, 120
    %v2862 = vpop.permute.xlu0 %2861
    %2863 = vrot.lane.b32.xlu0 %v2814, 120
    %v2864 = vpop.permute.xlu0 %2863
    %2865 = vrot.lane.b32.xlu0 %v2815, 120
    %v2866 = vpop.permute.xlu0 %2865
    %2867 = vrot.lane.b32.xlu0 %v2816, 120
    %v2868 = vpop.permute.xlu0 %2867
    %2869 = vrot.lane.b32.xlu0 %v2817, 120
    %v2870 = vpop.permute.xlu0 %2869
    %2871 = vrot.lane.b32.xlu0 %v2818, 120
    %v2872 = vpop.permute.xlu0 %2871
    %2873 = vrot.lane.b32.xlu0 %v2819, 120
    %v2874 = vpop.permute.xlu0 %2873
    %2875 = vrot.lane.b32.xlu0 %v2820, 120
    %v2876 = vpop.permute.xlu0 %2875
    %2877 = vrot.lane.b32.xlu0 %v2821, 120
    %v2878 = vpop.permute.xlu0 %2877
    %2879 = vrot.lane.b32.xlu0 %v2822, 120
    %v2880 = vpop.permute.xlu0 %2879
    %2881 = vrot.lane.b32.xlu0 %v2823, 120
    %v2882 = vpop.permute.xlu0 %2881
    %2883 = vrot.lane.b32.xlu0 %v2824, 120
    %v2884 = vpop.permute.xlu0 %2883
    %2885 = vrot.lane.b32.xlu0 %v2825, 120
    %v2886 = vpop.permute.xlu0 %2885
    %2887 = vrot.lane.b32.xlu0 %v2826, 120
    %v2888 = vpop.permute.xlu0 %2887
    %2889 = vrot.lane.b32.xlu0 %v2827, 120
    %v2890 = vpop.permute.xlu0 %2889
    %2891 = vrot.lane.b32.xlu0 %v2828, 120
    %v2892 = vpop.permute.xlu0 %2891
    %2893 = vrot.lane.b32.xlu0 %v2829, 120
    %v2894 = vpop.permute.xlu0 %2893
    %2895 = vrot.lane.b32.xlu0 %v2830, 120
    %v2896 = vpop.permute.xlu0 %2895
    %2897 = vrot.lane.b32.xlu0 %v2831, 120
    %v2898 = vpop.permute.xlu0 %2897
    %2899 = vrot.lane.b32.xlu0 %v2832, 120
    %v2900 = vpop.permute.xlu0 %2899
    %2901 = vrot.lane.b32.xlu0 %v2833, 120
    %v2902 = vpop.permute.xlu0 %2901
    %2903 = vrot.lane.b32.xlu0 %v2834, 120
    %v2904 = vpop.permute.xlu0 %2903
    %2905 = vrot.lane.b32.xlu0 %v2835, 120
    %v2906 = vpop.permute.xlu0 %2905
    %2907 = vrot.lane.b32.xlu0 %v2836, 120
    %v2908 = vpop.permute.xlu0 %2907
    %v2933 = vmul.f32 %v2733, %v2862
    %v2934 = vmul.f32 %v2734, %v2864
    %v2935 = vmul.f32 %v2735, %v2866
    %v2936 = vmul.f32 %v2736, %v2868
    %v2937 = vmul.f32 %v2737, %v2870
    %v2938 = vmul.f32 %v2738, %v2872
    %v2939 = vmul.f32 %v2739, %v2874
    %v2940 = vmul.f32 %v2740, %v2876
    %v2941 = vmul.f32 %v2741, %v2878
    %v2942 = vmul.f32 %v2742, %v2880
    %v2943 = vmul.f32 %v2743, %v2882
    %v2944 = vmul.f32 %v2744, %v2884
    %v2945 = vmul.f32 %v2745, %v2886
    %v2946 = vmul.f32 %v2746, %v2888
    %v2947 = vmul.f32 %v2747, %v2890
    %v2948 = vmul.f32 %v2748, %v2892
    %v2949 = vmul.f32 %v2749, %v2894
    %v2950 = vmul.f32 %v2750, %v2896
    %v2951 = vmul.f32 %v2751, %v2898
    %v2952 = vmul.f32 %v2752, %v2900
    %v2953 = vmul.f32 %v2753, %v2902
    %v2954 = vmul.f32 %v2754, %v2904
    %v2955 = vmul.f32 %v2755, %v2906
    %v2956 = vmul.f32 %v2756, %v2908
    %vm2957 = vcmask 1047556
    %v2958 = vsel %vm2957, %v2933, -inf
    %v2959 = vmax.f32 %v2958, %v2934
    %v2960 = vsel %vm1911, %v2935, -inf
    %v2961 = vmax.f32 %v2959, %v2960
    %v2962 = vrot.slane %v2961, 4
    %v2963 = vmax.f32 %v2961, %v2962
    %v2964 = vrot.slane %v2963, 2
    %v2965 = vmax.f32 %v2963, %v2964
    %v2966 = vrot.slane %v2965, 1
    %v2967 = vmax.f32 %v2965, %v2966
    %v2968 = vsel %vm2957, %v2936, -inf
    %v2969 = vmax.f32 %v2968, %v2937
    %v2970 = vsel %vm1911, %v2938, -inf
    %v2971 = vmax.f32 %v2969, %v2970
    %v2972 = vrot.slane %v2971, 4
    %v2973 = vmax.f32 %v2971, %v2972
    %v2974 = vrot.slane %v2973, 2
    %v2975 = vmax.f32 %v2973, %v2974
    %v2976 = vrot.slane %v2975, 1
    %v2977 = vmax.f32 %v2975, %v2976
    %v2978 = vsel %vm2957, %v2939, -inf
    %v2979 = vmax.f32 %v2978, %v2940
    %v2980 = vsel %vm1911, %v2941, -inf
    %v2981 = vmax.f32 %v2979, %v2980
    %v2982 = vrot.slane %v2981, 4
    %v2983 = vmax.f32 %v2981, %v2982
    %v2984 = vrot.slane %v2983, 2
    %v2985 = vmax.f32 %v2983, %v2984
    %v2986 = vrot.slane %v2985, 1
    %v2987 = vmax.f32 %v2985, %v2986
    %v2988 = vsel %vm2957, %v2942, -inf
    %v2989 = vmax.f32 %v2988, %v2943
    %v2990 = vsel %vm1911, %v2944, -inf
    %v2991 = vmax.f32 %v2989, %v2990
    %v2992 = vrot.slane %v2991, 4
    %v2993 = vmax.f32 %v2991, %v2992
    %v2994 = vrot.slane %v2993, 2
    %v2995 = vmax.f32 %v2993, %v2994
    %v2996 = vrot.slane %v2995, 1
    %v2997 = vmax.f32 %v2995, %v2996
    %v2998 = vsel %vm2957, %v2945, -inf
    %v2999 = vmax.f32 %v2998, %v2946
    %v3000 = vsel %vm1911, %v2947, -inf
    %v3001 = vmax.f32 %v2999, %v3000
    %v3002 = vrot.slane %v3001, 4
    %v3003 = vmax.f32 %v3001, %v3002
    %v3004 = vrot.slane %v3003, 2
    %v3005 = vmax.f32 %v3003, %v3004
    %v3006 = vrot.slane %v3005, 1
    %v3007 = vmax.f32 %v3005, %v3006
    %v3008 = vsel %vm2957, %v2948, -inf
    %v3009 = vmax.f32 %v3008, %v2949
    %v3010 = vsel %vm1911, %v2950, -inf
    %v3011 = vmax.f32 %v3009, %v3010
    %v3012 = vrot.slane %v3011, 4
    %v3013 = vmax.f32 %v3011, %v3012
    %v3014 = vrot.slane %v3013, 2
    %v3015 = vmax.f32 %v3013, %v3014
    %v3016 = vrot.slane %v3015, 1
    %v3017 = vmax.f32 %v3015, %v3016
    %v3018 = vsel %vm2957, %v2951, -inf
    %v3019 = vmax.f32 %v3018, %v2952
    %v3020 = vsel %vm1911, %v2953, -inf
    %v3021 = vmax.f32 %v3019, %v3020
    %v3022 = vrot.slane %v3021, 4
    %v3023 = vmax.f32 %v3021, %v3022
    %v3024 = vrot.slane %v3023, 2
    %v3025 = vmax.f32 %v3023, %v3024
    %v3026 = vrot.slane %v3025, 1
    %v3027 = vmax.f32 %v3025, %v3026
    %v3028 = vsel %vm2957, %v2954, -inf
    %v3029 = vmax.f32 %v3028, %v2955
    %v3030 = vsel %vm1911, %v2956, -inf
    %v3031 = vmax.f32 %v3029, %v3030
    %v3032 = vrot.slane %v3031, 4
    %v3033 = vmax.f32 %v3031, %v3032
    %v3034 = vrot.slane %v3033, 2
    %v3035 = vmax.f32 %v3033, %v3034
    %v3036 = vrot.slane %v3035, 1
    %v3037 = vmax.f32 %v3035, %v3036
    %v3038 = vld [vmem:[%s4] sm:$0xff]
    %v3039 = vld [vmem:[%s4 + $0x8] sm:$0xff]
    %v3040 = vld [vmem:[%s4 + $0x10] sm:$0xff]
    %v3041 = vld [vmem:[%s4 + $0x18] sm:$0xff]
    %v3042 = vld [vmem:[%s4 + $0x20] sm:$0xff]
    %v3043 = vld [vmem:[%s4 + $0x28] sm:$0xff]
    %v3044 = vld [vmem:[%s4 + $0x30] sm:$0xff]
    %v3045 = vld [vmem:[%s4 + $0x38] sm:$0xff]
    %v3046 = vld [vmem:[%s4 + $0x40] sm:$0xff]
    %v3047 = vld [vmem:[%s4 + $0x48] sm:$0xff]
    %v3048 = vld [vmem:[%s4 + $0x50] sm:$0xff]
    %v3049 = vld [vmem:[%s4 + $0x58] sm:$0xff]
    %v3050 = vld [vmem:[%s4 + $0x60] sm:$0xff]
    %v3051 = vld [vmem:[%s4 + $0x68] sm:$0xff]
    %v3052 = vld [vmem:[%s4 + $0x70] sm:$0xff]
    %v3053 = vld [vmem:[%s4 + $0x78] sm:$0xff]
    %v3054 = vld [vmem:[%s5] sm:$0x1]
    %v3056 = vlaneseq
    %v3057 = vshrl.u32 %v3056, 7
    %v3058 = vsub.s32 0, %v3057
    %v3059 = vrot.slane %v3054, %v3058
    %vm3069 = vcmask 1041409
    %v3070 = vsel %vm3069, %v2977, %v2967
    %vm3071 = vcmask 1042434
    %v3072 = vsel %vm3071, %v2987, %v3070
    %vm3073 = vcmask 1043459
    %v3074 = vsel %vm3073, %v2997, %v3072
    %vm3075 = vcmask 1044484
    %v3076 = vsel %vm3075, %v3007, %v3074
    %vm3077 = vcmask 1045509
    %v3078 = vsel %vm3077, %v3017, %v3076
    %vm3079 = vcmask 1046534
    %v3080 = vsel %vm3079, %v3027, %v3078
    %vm3081 = vcmask 1047559
    %v3082 = vsel %vm3081, %v3037, %v3080
    %3084 = vmatprep.subr.mxu0 0.0
    %3085 = vmatpush1.msra.mxu0 %v3038
    %3086 = vmatprep.subr.mxu0 0.0
    %3087 = vmatpush1.msra.mxu0 %v3039
    %3088 = vmatprep.subr.mxu0 0.0
    %3089 = vmatpush1.msra.mxu0 %v3040
    %3090 = vmatprep.subr.mxu0 0.0
    %3091 = vmatpush1.msra.mxu0 %v3041
    %3092 = vmatprep.subr.mxu0 0.0
    %3093 = vmatpush1.msra.mxu0 %v3042
    %3094 = vmatprep.subr.mxu0 0.0
    %3095 = vmatpush1.msra.mxu0 %v3043
    %3096 = vmatprep.subr.mxu0 0.0
    %3097 = vmatpush1.msra.mxu0 %v3044
    %3098 = vmatprep.subr.mxu0 0.0
    %3099 = vmatpush1.msra.mxu0 %v3045
    %3100 = vmatprep.subr.mxu0 0.0
    %3101 = vmatpush1.msra.mxu0 %v3046
    %3102 = vmatprep.subr.mxu0 0.0
    %3103 = vmatpush1.msra.mxu0 %v3047
    %3104 = vmatprep.subr.mxu0 0.0
    %3105 = vmatpush1.msra.mxu0 %v3048
    %3106 = vmatprep.subr.mxu0 0.0
    %3107 = vmatpush1.msra.mxu0 %v3049
    %3108 = vmatprep.subr.mxu0 0.0
    %3109 = vmatpush1.msra.mxu0 %v3050
    %3110 = vmatprep.subr.mxu0 0.0
    %3111 = vmatpush1.msra.mxu0 %v3051
    %3112 = vmatprep.subr.mxu0 0.0
    %3113 = vmatpush1.msra.mxu0 %v3052
    %3114 = vmatprep.subr.mxu0 0.0
    %3115 = vmatpush1.msra.mxu0 %v3053
    %3116 = vmatprep.subr.mxu0 0.0
    %3117 = vmatpush1.msra.mxu0 0.0
    %3118 = vmatprep.subr.mxu0 0.0
    %3119 = vmatpush1.msra.mxu0 0.0
    %3120 = vmatprep.subr.mxu0 0.0
    %3121 = vmatpush1.msra.mxu0 0.0
    %3122 = vmatprep.subr.mxu0 0.0
    %3123 = vmatpush1.msra.mxu0 0.0
    %3124 = vmatprep.subr.mxu0 0.0
    %3125 = vmatpush1.msra.mxu0 0.0
    %3126 = vmatprep.subr.mxu0 0.0
    %3127 = vmatpush1.msra.mxu0 0.0
    %3128 = vmatprep.subr.mxu0 0.0
    %3129 = vmatpush1.msra.mxu0 0.0
    %3130 = vmatprep.subr.mxu0 0.0
    %3131 = vmatpush1.msra.mxu0 0.0
    %3132 = vmatprep.subr.mxu0 0.0
    %3133 = vmatpush1.msra.mxu0 0.0
    %3134 = vmatprep.subr.mxu0 0.0
    %3135 = vmatpush1.msra.mxu0 0.0
    %3136 = vmatprep.subr.mxu0 0.0
    %3137 = vmatpush1.msra.mxu0 0.0
    %3138 = vmatprep.subr.mxu0 0.0
    %3139 = vmatpush1.msra.mxu0 0.0
    %3140 = vmatprep.subr.mxu0 0.0
    %3141 = vmatpush1.msra.mxu0 0.0
    %3142 = vmatprep.subr.mxu0 0.0
    %3143 = vmatpush1.msra.mxu0 0.0
    %3144 = vmatprep.subr.mxu0 0.0
    %3145 = vmatpush1.msra.mxu0 0.0
    %3146 = vmatprep.subr.mxu0 0.0
    %3147 = vmatpush1.msra.mxu0 0.0
    %3148 = vmatprep.mubr.f32.mxu0 0.0
    %3149 = vmatmul.mubr.f32.gmra.mrb[0].mxu0 %v3082
    %v3150 = vpop.f32.mrb[0].mxu0
    %v3151 = vadd.f32 %v3059, %v3150
    %v3152 = vpop.f32.mrb[0].mxu0
    %3153 = vdwg.mxu0
    %3154 = vst [vmem:[#allocation2] sm:$0xff] %v3151
    // Predicated region
    $region26: #{tpu_custom_call.1} parent=1 // pred_check
      _
    $region27: #{tpu_custom_call.1} parent=1 // pred_check_branch
      %3156 = sbr.rel (0) target = $region29
    $region28: #{tpu_custom_call.1} parent=1 // pred_region
      %s3158 = ssub.s32 128, 128
      %3159 = vsyncadd [#allocation3], %s3158
      %s3161 = sshll.u32 [#allocation2], 4
      %s3162 = int_to_ptr.vmem [resolvable:$true] %s3161
      %3164 = dma.vmem_to_hbm [thread:$0]  %s3162, 128, %s6, [#allocation3]
    $region29: #{tpu_custom_call.1} parent=1 // pred_fallthru
      _
    // Predicated region
    $region30: #{tpu_custom_call.1} parent=1 // pred_check
      _
    $region31: #{tpu_custom_call.1} parent=1 // pred_check_branch
      %3166 = sbr.rel (0) target = $region33
    $region32: #{tpu_custom_call.1} parent=1 // pred_region
      %3167 = dma.done [#allocation3], 128
    $region33: #{tpu_custom_call.1} parent=1 // pred_fallthru
      _
    %3168 = vsyncpa [#allocation3], 1

</llo_original>
